<compile_context>
chip_gen: v5e
topology: v5e:2x2
jax: 0.10.0
libtpu: 0.0.40
codegen_flags: <defaults>
</compile_context>

<pallas_src>
import functools
import math

import numpy as np

import jax
import jax.numpy as jnp
from jax.experimental import pallas as pl
from jax.experimental.pallas import tpu as pltpu


# ----------------------------------------------------------------------------
# Fused whole-network kernel (one program == one chunk of batch sequences)
# ----------------------------------------------------------------------------
def _small_vit_kernel(patches_ref, pos_ref, pw_ref, pb_ref,
                      wqkv_ref, bqkv_ref, wo_ref, bo_ref, g1_ref, be1_ref,
                      wf1_ref, bf1_ref, wf2_ref, bf2_ref, g2_ref, be2_ref,
                      wu1_ref, bu1_ref, wu2_ref, bu2_ref,
                      hmask_ref, sbias_ref, bsum_ref,
                      o_ref, *, num_heads, head_dim, depth, use_bf16):
    f32 = jnp.float32
    D = num_heads * head_dim
    scale = 1.0 / math.sqrt(head_dim)
    mx_dt = jnp.bfloat16 if use_bf16 else f32

    def mx(a):                       # MXU-operand cast; accumulation stays f32
        return a.astype(mx_dt)

    def layer_norm(v, g, b):
        m = jnp.mean(v, axis=-1, keepdims=True)
        c = v - m
        var = jnp.mean(c * c, axis=-1, keepdims=True)
        return c * jax.lax.rsqrt(var + 1e-5) * g + b

    hmask = hmask_ref[...]           # (CNH, D)  0/1 head selector
    sbias = sbias_ref[...]           # (M, CNH)  0 / -1e30 cross-sequence mask
    bsum = bsum_ref[...]             # (CNH, CNH) per-head block-sum (softmax denom)

    # ---- patch embedding (Conv2d stride==kernel as matmul) + pos embed ----
    tokens = (jnp.dot(mx(patches_ref[...]), pw_ref[...], preferred_element_type=f32)
              + pb_ref[...] + pos_ref[...])                         # (M, D)

    # ---- transformer encoder stack (post-norm, batch_first, eval mode) ----
    # NOTE: at depth=2 a fully unrolled Python loop over VMEM-resident stacked
    # weights is fine; for large depth move the layer index onto an
    # "arbitrary" grid axis and stream per-layer weights instead.
    for l in range(depth):
        qkv = jnp.dot(mx(tokens), wqkv_ref[l], preferred_element_type=f32) + bqkv_ref[l]
        q = qkv[:, :D]
        k = qkv[:, D:2 * D]
        v = qkv[:, 2 * D:]

        # Block-diagonal all-heads / all-sequences attention.
        # Columns of the score matrix are ordered (head, seq, key).
        k_big = jnp.concatenate([k] * num_heads, axis=0) * hmask     # (CNH, D)
        v_big = jnp.concatenate([v] * num_heads, axis=0) * hmask     # (CNH, D)
        s = jax.lax.dot_general(mx(q), mx(k_big), (((1,), (1,)), ((), ())),
                                preferred_element_type=f32) * scale + sbias
        # Per-row GLOBAL max: softmax is invariant to a per-row constant and
        # the global max >= every per-block max, so exp stays <= 1.
        s = s - jnp.max(s, axis=-1, keepdims=True)
        p = jnp.exp(s)                                               # (M, CNH) f32
        denom = jnp.dot(p, bsum, preferred_element_type=f32)         # per-head denom
        p = p * pl.reciprocal(denom, approx=True)                    # EUP slot
        ctx = jnp.dot(mx(p), mx(v_big), preferred_element_type=f32)  # (M, D), heads concat'd
        attn = jnp.dot(mx(ctx), wo_ref[l], preferred_element_type=f32) + bo_ref[l]
        # NOTE: dropout layers are eval-mode no-ops.
        tokens = layer_norm(tokens + attn, g1_ref[l], be1_ref[l])

        h1 = jnp.dot(mx(tokens), wf1_ref[l], preferred_element_type=f32) + bf1_ref[l]
        # TODO(synk): PyTorch F.gelu default is the exact erf GELU; tanh approximation used here.
        h1 = jax.nn.gelu(h1, approximate=True)
        ff = jnp.dot(mx(h1), wf2_ref[l], preferred_element_type=f32) + bf2_ref[l]
        tokens = layer_norm(tokens + ff, g2_ref[l], be2_ref[l])

    # ---- up path: ConvT1(+folded BN)+ReLU, ConvT2 as block-diagonal matmul ----
    y1 = jnp.dot(mx(tokens), wu1_ref[...], preferred_element_type=f32) + bu1_ref[...]
    y1 = jnp.maximum(y1, 0.0)                                        # (M, k1*k1*C1)
    y2 = jnp.dot(mx(y1), wu2_ref[...], preferred_element_type=f32) + bu2_ref[...]
    o_ref[...] = y2.astype(o_ref.dtype)                              # (M, nc*P*P)


# ----------------------------------------------------------------------------
# One-time (outside jit) weight / constant preparation
# ----------------------------------------------------------------------------
def prepare_params(params, cfg, batch_size, use_bf16=True, seqs_per_program=None):
    P = cfg["patch_size"]
    D = cfg["embed_dim"]
    nh = cfg["num_heads"]
    nc = cfg["num_classes"]
    Hp = cfg["image_size"] // P
    N = Hp * Hp
    hd = D // nh
    C1 = D // 2
    k1 = P // 2
    U1 = k1 * k1 * C1
    U2 = nc * P * P
    B = batch_size
    f32 = jnp.float32
    wdt = jnp.bfloat16 if use_bf16 else f32

    # --- how many sequences share one program (fold batch into matmul M rows) ---
    if seqs_per_program is None:
        chunk = min(B, max(1, 128 // N))         # aim for ~128 MXU rows
        while B % chunk:                         # keep the grid exact
            chunk -= 1
        # TODO(synk): on v7x (2 TensorCores) prefer seqs_per_program=B//2 for B>=2
        # so both cores get a "parallel" grid step.
    else:
        chunk = seqs_per_program
    assert B % chunk == 0, (B, chunk)
    M = chunk * N                 # rows per program
    CNH = nh * M                  # block-diagonal score columns (head, seq, key)

    def w(a):
        return jnp.asarray(a, f32).astype(wdt)

    # --- fold eval-mode BatchNorm2d into ConvTranspose2d #1 (cols (kh, kw, c1)) ---
    bn_scale = params["bn_gamma"] * jax.lax.rsqrt(params["bn_var"] + 1e-5)   # (C1,)
    bn_shift = params["bn_beta"] - params["bn_mean"] * bn_scale
    w1 = params["up1_w"].transpose(0, 2, 3, 1).reshape(D, U1)
    sc = jnp.tile(bn_scale, k1 * k1)
    sh = jnp.tile(bn_shift, k1 * k1)
    w1_eff = w1 * sc[None, :]
    b1_eff = (jnp.tile(params["up1_b"], k1 * k1) * sc + sh).reshape(1, U1)

    # --- ConvTranspose2d #2 expanded to a block-diagonal matmul weight ---
    # rows ordered (kh, kw, c1); cols ordered (c, ph, pw) with ph=2*kh+dh, pw=2*kw+dw.
    w2 = params["up2_w"]                                        # (C1, nc, 2, 2)
    pidx = jnp.arange(P)
    sel = (pidx[None, :] // 2 == jnp.arange(k1)[:, None]).astype(f32)       # (k1, P)
    w2_pix = w2[:, :, pidx % 2][:, :, :, pidx % 2]              # (C1, nc, P, P)
    w2_big = (sel[:, None, None, None, :, None] *
              sel[None, :, None, None, None, :] *
              w2_pix[None, None]).reshape(U1, U2)
    b2_big = jnp.repeat(params["up2_b"], P * P).reshape(1, U2)

    # --- attention block-diagonal constants (columns ordered (head, seq, key)) ---
    col = np.arange(CNH)
    col_head = col // M
    col_seq = (col % M) // N
    row_seq = np.arange(M) // N
    head_mask = (col_head[:, None] == (np.arange(D) // hd)[None, :]).astype(np.float32)
    seq_bias = np.where(row_seq[:, None] == col_seq[None, :], 0.0, -1e30).astype(np.float32)
    blk_sum = (col_head[:, None] == col_head[None, :]).astype(np.float32)

    prep = {
        "pos_big": jnp.tile(jnp.asarray(params["pos_embed"], f32), (chunk, 1)),
        "patch_w": w(params["patch_w"]), "patch_b": jnp.asarray(params["patch_b"], f32),
        "wqkv": w(params["wqkv"]), "bqkv": jnp.asarray(params["bqkv"], f32),
        "wo": w(params["wo"]), "bo": jnp.asarray(params["bo"], f32),
        "ln1_g": jnp.asarray(params["ln1_g"], f32), "ln1_b": jnp.asarray(params["ln1_b"], f32),
        "wf1": w(params["wf1"]), "bf1": jnp.asarray(params["bf1"], f32),
        "wf2": w(params["wf2"]), "bf2": jnp.asarray(params["bf2"], f32),
        "ln2_g": jnp.asarray(params["ln2_g"], f32), "ln2_b": jnp.asarray(params["ln2_b"], f32),
        "w1_eff": w(w1_eff), "b1_eff": jnp.asarray(b1_eff, f32),
        "w2_big": w(w2_big), "b2_big": jnp.asarray(b2_big, f32),
        "head_mask": jnp.asarray(head_mask),
        "seq_bias": jnp.asarray(seq_bias),
        "blk_sum": jnp.asarray(blk_sum),
    }
    run_cfg = dict(cfg)
    run_cfg.update(chunk=chunk, use_bf16=use_bf16)
    return prep, run_cfg


# ----------------------------------------------------------------------------
# Full SmallViT forward (one pallas_call + one tiny final NCHW emit)
# ----------------------------------------------------------------------------
def small_vit_forward(x, prep, cfg):
    B, C, Himg, Wimg = x.shape
    P = cfg["patch_size"]
    D = cfg["embed_dim"]
    nh = cfg["num_heads"]
    L = cfg["depth"]
    nc = cfg["num_classes"]
    Hp, Wp = Himg // P, Wimg // P
    N = Hp * Wp
    hd = D // nh
    F = 4 * D
    C1 = D // 2
    k1 = P // 2
    CPP = C * P * P
    U1 = k1 * k1 * C1
    U2 = nc * P * P
    chunk = cfg["chunk"]
    M = chunk * N
    CNH = nh * M
    n_prog = B // chunk

    # --- patch extraction: rows (b, hp, wp), cols (c, ph, pw)  (single XLA op) ---
    patches = (x.reshape(B, C, Hp, P, Wp, P)
                 .transpose(0, 2, 4, 1, 3, 5)
                 .reshape(B * N, CPP)).astype(jnp.float32)

    def const(shape):
        zeros = (0,) * len(shape)
        return pl.BlockSpec(shape, lambda g: zeros)

    in_specs = [
        pl.BlockSpec((M, CPP), lambda g: (g, 0)),         # patches (chunk of sequences)
        const((M, D)),                                    # pos_embed (tiled over chunk)
        const((CPP, D)), const((1, D)),                   # patch embed w, b
        const((L, D, 3 * D)), const((L, 1, 3 * D)),       # fused QKV w, b
        const((L, D, D)), const((L, 1, D)),               # attn out proj w, b
        const((L, 1, D)), const((L, 1, D)),               # LN1 gamma, beta
        const((L, D, F)), const((L, 1, F)),               # FFN linear1 w, b
        const((L, F, D)), const((L, 1, D)),               # FFN linear2 w, b
        const((L, 1, D)), const((L, 1, D)),               # LN2 gamma, beta
        const((D, U1)), const((1, U1)),                   # up1 (BN folded)
        const((U1, U2)), const((1, U2)),                  # up2 (block-diagonal)
        const((CNH, D)),                                  # head mask
        const((M, CNH)),                                  # cross-sequence additive bias
        const((CNH, CNH)),                                # per-head block-sum
    ]

    kernel = functools.partial(_small_vit_kernel, num_heads=nh, head_dim=hd,
                               depth=L, use_bf16=cfg["use_bf16"])
    y2 = pl.pallas_call(
        kernel,
        grid=(n_prog,),
        in_specs=in_specs,
        out_specs=pl.BlockSpec((M, U2), lambda g: (g, 0)),
        out_shape=jax.ShapeDtypeStruct((B * N, U2), jnp.float32),
        compiler_params=pltpu.CompilerParams(dimension_semantics=("parallel",)),
    )(patches, prep["pos_big"], prep["patch_w"], prep["patch_b"],
      prep["wqkv"], prep["bqkv"], prep["wo"], prep["bo"],
      prep["ln1_g"], prep["ln1_b"], prep["wf1"], prep["bf1"],
      prep["wf2"], prep["bf2"], prep["ln2_g"], prep["ln2_b"],
      prep["w1_eff"], prep["b1_eff"], prep["w2_big"], prep["b2_big"],
      prep["head_mask"], prep["seq_bias"], prep["blk_sum"])

    # --- single final patch -> NCHW emit (tiny array, one XLA op) ---
    out = (y2.reshape(B, Hp, Wp, nc, P, P)
             .transpose(0, 3, 1, 4, 2, 5)
             .reshape(B, nc, Himg, Wimg))
    return out


# ----------------------------------------------------------------------------
# Deterministic parameter initialization (matmul layouts; shapes follow
# SmallViT.__init__; pos_embed initialized to zeros as in the PyTorch module).
# ----------------------------------------------------------------------------
def init_params(key, cfg):
    P = cfg["patch_size"]
    D = cfg["embed_dim"]
    L = cfg["depth"]
    nc = cfg["num_classes"]
    Hp = cfg["image_size"] // P
    N = Hp * Hp
    C1 = D // 2
    k1 = P // 2
    F = 4 * D

    keys = iter(jax.random.split(key, 16))

    def nrm(shape, s=0.02):
        return s * jax.random.normal(next(keys), shape, jnp.float32)

    params = {
        # Conv2d(3, D, P, P) weight as (in=(c,ph,pw), out=d) matmul layout
        "patch_w": nrm((3 * P * P, D)),
        "patch_b": nrm((1, D)),
        "pos_embed": jnp.zeros((N, D), jnp.float32),
        # per-layer weights stacked along a leading depth axis, QKV fused
        "wqkv": nrm((L, D, 3 * D)), "bqkv": nrm((L, 1, 3 * D)),
        "wo": nrm((L, D, D)), "bo": nrm((L, 1, D)),
        "ln1_g": jnp.ones((L, 1, D), jnp.float32),
        "ln1_b": jnp.zeros((L, 1, D), jnp.float32),
        "wf1": nrm((L, D, F)), "bf1": nrm((L, 1, F)),
        "wf2": nrm((L, F, D)), "bf2": nrm((L, 1, D)),
        "ln2_g": jnp.ones((L, 1, D), jnp.float32),
        "ln2_b": jnp.zeros((L, 1, D), jnp.float32),
        # ConvTranspose2d(D, C1, k1, k1) weight (in, out, kh, kw) + BN stats
        "up1_w": nrm((D, C1, k1, k1)), "up1_b": nrm((C1,)),
        "bn_gamma": jnp.ones((C1,), jnp.float32),
        "bn_beta": jnp.zeros((C1,), jnp.float32),
        "bn_mean": jnp.zeros((C1,), jnp.float32),
        "bn_var": jnp.ones((C1,), jnp.float32),
        # ConvTranspose2d(C1, nc, 2, 2) weight (in, out, kh, kw)
        "up2_w": nrm((C1, nc, 2, 2)), "up2_b": nrm((nc,)),
    }
    return params


if __name__ == "__main__":
    cfg = dict(image_size=32, patch_size=8, embed_dim=32,
               num_heads=4, depth=2, num_classes=1)

    key = jax.random.PRNGKey(0)
    kp, kx = jax.random.split(key)
    params = init_params(kp, cfg)
    B = 2
    x = jax.random.normal(kx, (B, 3, cfg["image_size"], cfg["image_size"]), jnp.float32)

    # One-time weight/constant preparation (outside jit), then the jitted forward.
    prep, run_cfg = prepare_params(params, cfg, batch_size=B, use_bf16=True)
    fwd = jax.jit(functools.partial(small_vit_forward, cfg=run_cfg))
    out = fwd(x, prep)
    jax.block_until_ready(out)

    expected = (B, cfg["num_classes"], cfg["image_size"], cfg["image_size"])
    assert out.shape == expected, (out.shape, expected)
    assert bool(jnp.all(jnp.isfinite(out)))
    print("KERNEL_OK")
</pallas_src>

<mosaic_0001>
module attributes {stable_mosaic.version = 11 : i64} {
  func.func @_small_vit_kernel(%arg0: i32, %arg1: memref<32x192xf32, #tpu.memory_space<vmem>>, %arg2: memref<32x32xf32, #tpu.memory_space<vmem>>, %arg3: memref<192x32xbf16, #tpu.memory_space<vmem>>, %arg4: memref<1x32xf32, #tpu.memory_space<vmem>>, %arg5: memref<2x32x96xbf16, #tpu.memory_space<vmem>>, %arg6: memref<2x1x96xf32, #tpu.memory_space<vmem>>, %arg7: memref<2x32x32xbf16, #tpu.memory_space<vmem>>, %arg8: memref<2x1x32xf32, #tpu.memory_space<vmem>>, %arg9: memref<2x1x32xf32, #tpu.memory_space<vmem>>, %arg10: memref<2x1x32xf32, #tpu.memory_space<vmem>>, %arg11: memref<2x32x128xbf16, #tpu.memory_space<vmem>>, %arg12: memref<2x1x128xf32, #tpu.memory_space<vmem>>, %arg13: memref<2x128x32xbf16, #tpu.memory_space<vmem>>, %arg14: memref<2x1x32xf32, #tpu.memory_space<vmem>>, %arg15: memref<2x1x32xf32, #tpu.memory_space<vmem>>, %arg16: memref<2x1x32xf32, #tpu.memory_space<vmem>>, %arg17: memref<32x256xbf16, #tpu.memory_space<vmem>>, %arg18: memref<1x256xf32, #tpu.memory_space<vmem>>, %arg19: memref<256x64xbf16, #tpu.memory_space<vmem>>, %arg20: memref<1x64xf32, #tpu.memory_space<vmem>>, %arg21: memref<128x32xf32, #tpu.memory_space<vmem>>, %arg22: memref<32x128xf32, #tpu.memory_space<vmem>>, %arg23: memref<128x128xf32, #tpu.memory_space<vmem>>, %arg24: memref<32x64xf32, #tpu.memory_space<vmem>>) attributes {dimension_semantics = [#tpu.dimension_semantics<parallel>], iteration_bounds = array<i64: 1>, scalar_prefetch = 0 : i64, scratch_operands = 0 : i64, tpu.core_type = #tpu.core_type<tc>, window_params = [{transform_indices = @transform_0, window_bounds = array<i64: 32, 192>}, {pipeline_mode = #tpu.pipeline_mode<synchronous>, transform_indices = @transform_1, window_bounds = array<i64: 32, 32>}, {pipeline_mode = #tpu.pipeline_mode<synchronous>, transform_indices = @transform_2, window_bounds = array<i64: 192, 32>}, {pipeline_mode = #tpu.pipeline_mode<synchronous>, transform_indices = @transform_3, window_bounds = array<i64: 1, 32>}, {pipeline_mode = #tpu.pipeline_mode<synchronous>, transform_indices = @transform_4, window_bounds = array<i64: 2, 32, 96>}, {pipeline_mode = #tpu.pipeline_mode<synchronous>, transform_indices = @transform_5, window_bounds = array<i64: 2, 1, 96>}, {pipeline_mode = #tpu.pipeline_mode<synchronous>, transform_indices = @transform_6, window_bounds = array<i64: 2, 32, 32>}, {pipeline_mode = #tpu.pipeline_mode<synchronous>, transform_indices = @transform_7, window_bounds = array<i64: 2, 1, 32>}, {pipeline_mode = #tpu.pipeline_mode<synchronous>, transform_indices = @transform_8, window_bounds = array<i64: 2, 1, 32>}, {pipeline_mode = #tpu.pipeline_mode<synchronous>, transform_indices = @transform_9, window_bounds = array<i64: 2, 1, 32>}, {pipeline_mode = #tpu.pipeline_mode<synchronous>, transform_indices = @transform_10, window_bounds = array<i64: 2, 32, 128>}, {pipeline_mode = #tpu.pipeline_mode<synchronous>, transform_indices = @transform_11, window_bounds = array<i64: 2, 1, 128>}, {pipeline_mode = #tpu.pipeline_mode<synchronous>, transform_indices = @transform_12, window_bounds = array<i64: 2, 128, 32>}, {pipeline_mode = #tpu.pipeline_mode<synchronous>, transform_indices = @transform_13, window_bounds = array<i64: 2, 1, 32>}, {pipeline_mode = #tpu.pipeline_mode<synchronous>, transform_indices = @transform_14, window_bounds = array<i64: 2, 1, 32>}, {pipeline_mode = #tpu.pipeline_mode<synchronous>, transform_indices = @transform_15, window_bounds = array<i64: 2, 1, 32>}, {pipeline_mode = #tpu.pipeline_mode<synchronous>, transform_indices = @transform_16, window_bounds = array<i64: 32, 256>}, {pipeline_mode = #tpu.pipeline_mode<synchronous>, transform_indices = @transform_17, window_bounds = array<i64: 1, 256>}, {pipeline_mode = #tpu.pipeline_mode<synchronous>, transform_indices = @transform_18, window_bounds = array<i64: 256, 64>}, {pipeline_mode = #tpu.pipeline_mode<synchronous>, transform_indices = @transform_19, window_bounds = array<i64: 1, 64>}, {pipeline_mode = #tpu.pipeline_mode<synchronous>, transform_indices = @transform_20, window_bounds = array<i64: 128, 32>}, {pipeline_mode = #tpu.pipeline_mode<synchronous>, transform_indices = @transform_21, window_bounds = array<i64: 32, 128>}, {pipeline_mode = #tpu.pipeline_mode<synchronous>, transform_indices = @transform_22, window_bounds = array<i64: 128, 128>}, {transform_indices = @transform_23, window_bounds = array<i64: 32, 64>}]} {
    %c0 = arith.constant 0 : index
    %c0_0 = arith.constant 0 : index
    %0 = vector.load %arg21[%c0, %c0_0] : memref<128x32xf32, #tpu.memory_space<vmem>>, vector<128x32xf32>
    %c0_1 = arith.constant 0 : index
    %c0_2 = arith.constant 0 : index
    %1 = vector.load %arg22[%c0_1, %c0_2] : memref<32x128xf32, #tpu.memory_space<vmem>>, vector<32x128xf32>
    %c0_3 = arith.constant 0 : index
    %c0_4 = arith.constant 0 : index
    %2 = vector.load %arg23[%c0_3, %c0_4] : memref<128x128xf32, #tpu.memory_space<vmem>>, vector<128x128xf32>
    %c0_5 = arith.constant 0 : index
    %c0_6 = arith.constant 0 : index
    %3 = vector.load %arg1[%c0_5, %c0_6] : memref<32x192xf32, #tpu.memory_space<vmem>>, vector<32x192xf32>
    %4 = arith.truncf %3 : vector<32x192xf32> to vector<32x192xbf16>
    %c0_7 = arith.constant 0 : index
    %c0_8 = arith.constant 0 : index
    %5 = vector.load %arg3[%c0_7, %c0_8] : memref<192x32xbf16, #tpu.memory_space<vmem>>, vector<192x32xbf16>
    %cst = arith.constant dense<0.000000e+00> : vector<32x32xf32>
    %6 = tpu.matmul %4, %5, %cst {dimension_numbers = #tpu.dot_dimension_numbers<[1], [0], [0], [1], [0, 0, 1, 1], [], []>} : vector<32x192xbf16>, vector<192x32xbf16>, vector<32x32xf32> -> vector<32x32xf32>
    %c0_9 = arith.constant 0 : index
    %c0_10 = arith.constant 0 : index
    %7 = vector.load %arg4[%c0_9, %c0_10] : memref<1x32xf32, #tpu.memory_space<vmem>>, vector<1x32xf32>
    %8 = vector.broadcast %7 : vector<1x32xf32> to vector<32x32xf32>
    %9 = arith.addf %6, %8 : vector<32x32xf32>
    %c0_11 = arith.constant 0 : index
    %c0_12 = arith.constant 0 : index
    %10 = vector.load %arg2[%c0_11, %c0_12] : memref<32x32xf32, #tpu.memory_space<vmem>>, vector<32x32xf32>
    %11 = arith.addf %9, %10 : vector<32x32xf32>
    %12 = arith.truncf %11 : vector<32x32xf32> to vector<32x32xbf16>
    %c0_13 = arith.constant 0 : index
    %c0_14 = arith.constant 0 : index
    %c0_15 = arith.constant 0 : index
    %13 = vector.load %arg5[%c0_13, %c0_14, %c0_15] : memref<2x32x96xbf16, #tpu.memory_space<vmem>>, vector<1x32x96xbf16>
    %14 = vector.shape_cast %13 : vector<1x32x96xbf16> to vector<32x96xbf16>
    %cst_16 = arith.constant dense<0.000000e+00> : vector<32x96xf32>
    %15 = tpu.matmul %12, %14, %cst_16 {dimension_numbers = #tpu.dot_dimension_numbers<[1], [0], [0], [1], [0, 0, 1, 1], [], []>} : vector<32x32xbf16>, vector<32x96xbf16>, vector<32x96xf32> -> vector<32x96xf32>
    %c0_17 = arith.constant 0 : index
    %c0_18 = arith.constant 0 : index
    %c0_19 = arith.constant 0 : index
    %16 = vector.load %arg6[%c0_17, %c0_18, %c0_19] : memref<2x1x96xf32, #tpu.memory_space<vmem>>, vector<1x1x96xf32>
    %17 = vector.shape_cast %16 : vector<1x1x96xf32> to vector<1x96xf32>
    %18 = vector.broadcast %17 : vector<1x96xf32> to vector<32x96xf32>
    %19 = arith.addf %15, %18 : vector<32x96xf32>
    %20 = vector.extract_strided_slice %19 {offsets = [0, 0], sizes = [32, 32], strides = [1, 1]} : vector<32x96xf32> to vector<32x32xf32>
    %21 = vector.extract_strided_slice %19 {offsets = [0, 32], sizes = [32, 32], strides = [1, 1]} : vector<32x96xf32> to vector<32x32xf32>
    %22 = vector.extract_strided_slice %19 {offsets = [0, 64], sizes = [32, 32], strides = [1, 1]} : vector<32x96xf32> to vector<32x32xf32>
    %23 = tpu.concatenate %21, %21, %21, %21 in 0 : vector<32x32xf32>, vector<32x32xf32>, vector<32x32xf32>, vector<32x32xf32> -> vector<128x32xf32>
    %24 = arith.mulf %23, %0 : vector<128x32xf32>
    %25 = tpu.concatenate %22, %22, %22, %22 in 0 : vector<32x32xf32>, vector<32x32xf32>, vector<32x32xf32>, vector<32x32xf32> -> vector<128x32xf32>
    %26 = arith.mulf %25, %0 : vector<128x32xf32>
    %27 = arith.truncf %20 : vector<32x32xf32> to vector<32x32xbf16>
    %28 = arith.truncf %24 : vector<128x32xf32> to vector<128x32xbf16>
    %cst_20 = arith.constant dense<0.000000e+00> : vector<32x128xf32>
    %29 = tpu.matmul %27, %28, %cst_20 {dimension_numbers = #tpu.dot_dimension_numbers<[1], [1], [0], [0], [0, 0, 1, 0], [], []>} : vector<32x32xbf16>, vector<128x32xbf16>, vector<32x128xf32> -> vector<32x128xf32>
    %cst_21 = arith.constant 0.353553385 : f32
    %30 = vector.broadcast %cst_21 : f32 to vector<32x128xf32>
    %31 = arith.mulf %29, %30 : vector<32x128xf32>
    %32 = arith.addf %31, %1 : vector<32x128xf32>
    %cst_22 = arith.constant dense<0xFF800000> : vector<32xf32>
    %33 = vector.multi_reduction <maximumf>, %32, %cst_22 [1] : vector<32x128xf32> to vector<32xf32>
    %34 = vector.shape_cast %33 : vector<32xf32> to vector<32x1xf32>
    %35 = vector.broadcast %34 : vector<32x1xf32> to vector<32x128xf32>
    %36 = arith.subf %32, %35 : vector<32x128xf32>
    %37 = math.exp %36 : vector<32x128xf32>
    %cst_23 = arith.constant dense<0.000000e+00> : vector<32x128xf32>
    %38 = tpu.matmul %37, %2, %cst_23 {dimension_numbers = #tpu.dot_dimension_numbers<[1], [0], [0], [1], [0, 0, 1, 1], [], []>} : vector<32x128xf32>, vector<128x128xf32>, vector<32x128xf32> -> vector<32x128xf32>
    %39 = tpu.reciprocal %38 {approx = true} : vector<32x128xf32> -> vector<32x128xf32>
    %40 = arith.mulf %37, %39 : vector<32x128xf32>
    %41 = arith.truncf %40 : vector<32x128xf32> to vector<32x128xbf16>
    %42 = arith.truncf %26 : vector<128x32xf32> to vector<128x32xbf16>
    %cst_24 = arith.constant dense<0.000000e+00> : vector<32x32xf32>
    %43 = tpu.matmul %41, %42, %cst_24 {dimension_numbers = #tpu.dot_dimension_numbers<[1], [0], [0], [1], [0, 0, 1, 1], [], []>} : vector<32x128xbf16>, vector<128x32xbf16>, vector<32x32xf32> -> vector<32x32xf32>
    %44 = arith.truncf %43 : vector<32x32xf32> to vector<32x32xbf16>
    %c0_25 = arith.constant 0 : index
    %c0_26 = arith.constant 0 : index
    %c0_27 = arith.constant 0 : index
    %45 = vector.load %arg7[%c0_25, %c0_26, %c0_27] : memref<2x32x32xbf16, #tpu.memory_space<vmem>>, vector<1x32x32xbf16>
    %46 = vector.shape_cast %45 : vector<1x32x32xbf16> to vector<32x32xbf16>
    %cst_28 = arith.constant dense<0.000000e+00> : vector<32x32xf32>
    %47 = tpu.matmul %44, %46, %cst_28 {dimension_numbers = #tpu.dot_dimension_numbers<[1], [0], [0], [1], [0, 0, 1, 1], [], []>} : vector<32x32xbf16>, vector<32x32xbf16>, vector<32x32xf32> -> vector<32x32xf32>
    %c0_29 = arith.constant 0 : index
    %c0_30 = arith.constant 0 : index
    %c0_31 = arith.constant 0 : index
    %48 = vector.load %arg8[%c0_29, %c0_30, %c0_31] : memref<2x1x32xf32, #tpu.memory_space<vmem>>, vector<1x1x32xf32>
    %49 = vector.shape_cast %48 : vector<1x1x32xf32> to vector<1x32xf32>
    %50 = vector.broadcast %49 : vector<1x32xf32> to vector<32x32xf32>
    %51 = arith.addf %47, %50 : vector<32x32xf32>
    %52 = arith.addf %11, %51 : vector<32x32xf32>
    %c0_32 = arith.constant 0 : index
    %c0_33 = arith.constant 0 : index
    %c0_34 = arith.constant 0 : index
    %53 = vector.load %arg9[%c0_32, %c0_33, %c0_34] : memref<2x1x32xf32, #tpu.memory_space<vmem>>, vector<1x1x32xf32>
    %54 = vector.shape_cast %53 : vector<1x1x32xf32> to vector<1x32xf32>
    %c0_35 = arith.constant 0 : index
    %c0_36 = arith.constant 0 : index
    %c0_37 = arith.constant 0 : index
    %55 = vector.load %arg10[%c0_35, %c0_36, %c0_37] : memref<2x1x32xf32, #tpu.memory_space<vmem>>, vector<1x1x32xf32>
    %56 = vector.shape_cast %55 : vector<1x1x32xf32> to vector<1x32xf32>
    %cst_38 = arith.constant dense<0.000000e+00> : vector<32xf32>
    %57 = vector.multi_reduction <add>, %52, %cst_38 [1] : vector<32x32xf32> to vector<32xf32>
    %58 = vector.shape_cast %57 : vector<32xf32> to vector<32x1xf32>
    %cst_39 = arith.constant 3.200000e+01 : f32
    %59 = vector.broadcast %cst_39 : f32 to vector<32x1xf32>
    %60 = arith.divf %58, %59 : vector<32x1xf32>
    %61 = vector.broadcast %60 : vector<32x1xf32> to vector<32x32xf32>
    %62 = arith.subf %52, %61 : vector<32x32xf32>
    %63 = arith.mulf %62, %62 : vector<32x32xf32>
    %cst_40 = arith.constant dense<0.000000e+00> : vector<32xf32>
    %64 = vector.multi_reduction <add>, %63, %cst_40 [1] : vector<32x32xf32> to vector<32xf32>
    %65 = vector.shape_cast %64 : vector<32xf32> to vector<32x1xf32>
    %cst_41 = arith.constant 3.200000e+01 : f32
    %66 = vector.broadcast %cst_41 : f32 to vector<32x1xf32>
    %67 = arith.divf %65, %66 : vector<32x1xf32>
    %cst_42 = arith.constant 9.99999974E-6 : f32
    %68 = vector.broadcast %cst_42 : f32 to vector<32x1xf32>
    %69 = arith.addf %67, %68 : vector<32x1xf32>
    %70 = math.rsqrt %69 : vector<32x1xf32>
    %71 = vector.broadcast %70 : vector<32x1xf32> to vector<32x32xf32>
    %72 = arith.mulf %62, %71 : vector<32x32xf32>
    %73 = vector.broadcast %54 : vector<1x32xf32> to vector<32x32xf32>
    %74 = arith.mulf %72, %73 : vector<32x32xf32>
    %75 = vector.broadcast %56 : vector<1x32xf32> to vector<32x32xf32>
    %76 = arith.addf %74, %75 : vector<32x32xf32>
    %77 = arith.truncf %76 : vector<32x32xf32> to vector<32x32xbf16>
    %c0_43 = arith.constant 0 : index
    %c0_44 = arith.constant 0 : index
    %c0_45 = arith.constant 0 : index
    %78 = vector.load %arg11[%c0_43, %c0_44, %c0_45] : memref<2x32x128xbf16, #tpu.memory_space<vmem>>, vector<1x32x128xbf16>
    %79 = vector.shape_cast %78 : vector<1x32x128xbf16> to vector<32x128xbf16>
    %cst_46 = arith.constant dense<0.000000e+00> : vector<32x128xf32>
    %80 = tpu.matmul %77, %79, %cst_46 {dimension_numbers = #tpu.dot_dimension_numbers<[1], [0], [0], [1], [0, 0, 1, 1], [], []>} : vector<32x32xbf16>, vector<32x128xbf16>, vector<32x128xf32> -> vector<32x128xf32>
    %c0_47 = arith.constant 0 : index
    %c0_48 = arith.constant 0 : index
    %c0_49 = arith.constant 0 : index
    %81 = vector.load %arg12[%c0_47, %c0_48, %c0_49] : memref<2x1x128xf32, #tpu.memory_space<vmem>>, vector<1x1x128xf32>
    %82 = vector.shape_cast %81 : vector<1x1x128xf32> to vector<1x128xf32>
    %83 = vector.broadcast %82 : vector<1x128xf32> to vector<32x128xf32>
    %84 = arith.addf %80, %83 : vector<32x128xf32>
    %85 = arith.mulf %84, %84 : vector<32x128xf32>
    %86 = arith.mulf %84, %85 : vector<32x128xf32>
    %cst_50 = arith.constant 4.471500e-02 : f32
    %87 = vector.broadcast %cst_50 : f32 to vector<32x128xf32>
    %88 = arith.mulf %87, %86 : vector<32x128xf32>
    %89 = arith.addf %84, %88 : vector<32x128xf32>
    %cst_51 = arith.constant 0.797884583 : f32
    %90 = vector.broadcast %cst_51 : f32 to vector<32x128xf32>
    %91 = arith.mulf %90, %89 : vector<32x128xf32>
    %92 = math.tanh %91 : vector<32x128xf32>
    %cst_52 = arith.constant 1.000000e+00 : f32
    %93 = vector.broadcast %cst_52 : f32 to vector<32x128xf32>
    %94 = arith.addf %93, %92 : vector<32x128xf32>
    %cst_53 = arith.constant 5.000000e-01 : f32
    %95 = vector.broadcast %cst_53 : f32 to vector<32x128xf32>
    %96 = arith.mulf %95, %94 : vector<32x128xf32>
    %97 = arith.mulf %84, %96 : vector<32x128xf32>
    %98 = arith.truncf %97 : vector<32x128xf32> to vector<32x128xbf16>
    %c0_54 = arith.constant 0 : index
    %c0_55 = arith.constant 0 : index
    %c0_56 = arith.constant 0 : index
    %99 = vector.load %arg13[%c0_54, %c0_55, %c0_56] : memref<2x128x32xbf16, #tpu.memory_space<vmem>>, vector<1x128x32xbf16>
    %100 = vector.shape_cast %99 : vector<1x128x32xbf16> to vector<128x32xbf16>
    %cst_57 = arith.constant dense<0.000000e+00> : vector<32x32xf32>
    %101 = tpu.matmul %98, %100, %cst_57 {dimension_numbers = #tpu.dot_dimension_numbers<[1], [0], [0], [1], [0, 0, 1, 1], [], []>} : vector<32x128xbf16>, vector<128x32xbf16>, vector<32x32xf32> -> vector<32x32xf32>
    %c0_58 = arith.constant 0 : index
    %c0_59 = arith.constant 0 : index
    %c0_60 = arith.constant 0 : index
    %102 = vector.load %arg14[%c0_58, %c0_59, %c0_60] : memref<2x1x32xf32, #tpu.memory_space<vmem>>, vector<1x1x32xf32>
    %103 = vector.shape_cast %102 : vector<1x1x32xf32> to vector<1x32xf32>
    %104 = vector.broadcast %103 : vector<1x32xf32> to vector<32x32xf32>
    %105 = arith.addf %101, %104 : vector<32x32xf32>
    %106 = arith.addf %76, %105 : vector<32x32xf32>
    %c0_61 = arith.constant 0 : index
    %c0_62 = arith.constant 0 : index
    %c0_63 = arith.constant 0 : index
    %107 = vector.load %arg15[%c0_61, %c0_62, %c0_63] : memref<2x1x32xf32, #tpu.memory_space<vmem>>, vector<1x1x32xf32>
    %108 = vector.shape_cast %107 : vector<1x1x32xf32> to vector<1x32xf32>
    %c0_64 = arith.constant 0 : index
    %c0_65 = arith.constant 0 : index
    %c0_66 = arith.constant 0 : index
    %109 = vector.load %arg16[%c0_64, %c0_65, %c0_66] : memref<2x1x32xf32, #tpu.memory_space<vmem>>, vector<1x1x32xf32>
    %110 = vector.shape_cast %109 : vector<1x1x32xf32> to vector<1x32xf32>
    %cst_67 = arith.constant dense<0.000000e+00> : vector<32xf32>
    %111 = vector.multi_reduction <add>, %106, %cst_67 [1] : vector<32x32xf32> to vector<32xf32>
    %112 = vector.shape_cast %111 : vector<32xf32> to vector<32x1xf32>
    %cst_68 = arith.constant 3.200000e+01 : f32
    %113 = vector.broadcast %cst_68 : f32 to vector<32x1xf32>
    %114 = arith.divf %112, %113 : vector<32x1xf32>
    %115 = vector.broadcast %114 : vector<32x1xf32> to vector<32x32xf32>
    %116 = arith.subf %106, %115 : vector<32x32xf32>
    %117 = arith.mulf %116, %116 : vector<32x32xf32>
    %cst_69 = arith.constant dense<0.000000e+00> : vector<32xf32>
    %118 = vector.multi_reduction <add>, %117, %cst_69 [1] : vector<32x32xf32> to vector<32xf32>
    %119 = vector.shape_cast %118 : vector<32xf32> to vector<32x1xf32>
    %cst_70 = arith.constant 3.200000e+01 : f32
    %120 = vector.broadcast %cst_70 : f32 to vector<32x1xf32>
    %121 = arith.divf %119, %120 : vector<32x1xf32>
    %cst_71 = arith.constant 9.99999974E-6 : f32
    %122 = vector.broadcast %cst_71 : f32 to vector<32x1xf32>
    %123 = arith.addf %121, %122 : vector<32x1xf32>
    %124 = math.rsqrt %123 : vector<32x1xf32>
    %125 = vector.broadcast %124 : vector<32x1xf32> to vector<32x32xf32>
    %126 = arith.mulf %116, %125 : vector<32x32xf32>
    %127 = vector.broadcast %108 : vector<1x32xf32> to vector<32x32xf32>
    %128 = arith.mulf %126, %127 : vector<32x32xf32>
    %129 = vector.broadcast %110 : vector<1x32xf32> to vector<32x32xf32>
    %130 = arith.addf %128, %129 : vector<32x32xf32>
    %131 = arith.truncf %130 : vector<32x32xf32> to vector<32x32xbf16>
    %c1 = arith.constant 1 : index
    %c0_72 = arith.constant 0 : index
    %c0_73 = arith.constant 0 : index
    %132 = vector.load %arg5[%c1, %c0_72, %c0_73] : memref<2x32x96xbf16, #tpu.memory_space<vmem>>, vector<1x32x96xbf16>
    %133 = vector.shape_cast %132 : vector<1x32x96xbf16> to vector<32x96xbf16>
    %cst_74 = arith.constant dense<0.000000e+00> : vector<32x96xf32>
    %134 = tpu.matmul %131, %133, %cst_74 {dimension_numbers = #tpu.dot_dimension_numbers<[1], [0], [0], [1], [0, 0, 1, 1], [], []>} : vector<32x32xbf16>, vector<32x96xbf16>, vector<32x96xf32> -> vector<32x96xf32>
    %c1_75 = arith.constant 1 : index
    %c0_76 = arith.constant 0 : index
    %c0_77 = arith.constant 0 : index
    %135 = vector.load %arg6[%c1_75, %c0_76, %c0_77] : memref<2x1x96xf32, #tpu.memory_space<vmem>>, vector<1x1x96xf32>
    %136 = vector.shape_cast %135 : vector<1x1x96xf32> to vector<1x96xf32>
    %137 = vector.broadcast %136 : vector<1x96xf32> to vector<32x96xf32>
    %138 = arith.addf %134, %137 : vector<32x96xf32>
    %139 = vector.extract_strided_slice %138 {offsets = [0, 0], sizes = [32, 32], strides = [1, 1]} : vector<32x96xf32> to vector<32x32xf32>
    %140 = vector.extract_strided_slice %138 {offsets = [0, 32], sizes = [32, 32], strides = [1, 1]} : vector<32x96xf32> to vector<32x32xf32>
    %141 = vector.extract_strided_slice %138 {offsets = [0, 64], sizes = [32, 32], strides = [1, 1]} : vector<32x96xf32> to vector<32x32xf32>
    %142 = tpu.concatenate %140, %140, %140, %140 in 0 : vector<32x32xf32>, vector<32x32xf32>, vector<32x32xf32>, vector<32x32xf32> -> vector<128x32xf32>
    %143 = arith.mulf %142, %0 : vector<128x32xf32>
    %144 = tpu.concatenate %141, %141, %141, %141 in 0 : vector<32x32xf32>, vector<32x32xf32>, vector<32x32xf32>, vector<32x32xf32> -> vector<128x32xf32>
    %145 = arith.mulf %144, %0 : vector<128x32xf32>
    %146 = arith.truncf %139 : vector<32x32xf32> to vector<32x32xbf16>
    %147 = arith.truncf %143 : vector<128x32xf32> to vector<128x32xbf16>
    %cst_78 = arith.constant dense<0.000000e+00> : vector<32x128xf32>
    %148 = tpu.matmul %146, %147, %cst_78 {dimension_numbers = #tpu.dot_dimension_numbers<[1], [1], [0], [0], [0, 0, 1, 0], [], []>} : vector<32x32xbf16>, vector<128x32xbf16>, vector<32x128xf32> -> vector<32x128xf32>
    %cst_79 = arith.constant 0.353553385 : f32
    %149 = vector.broadcast %cst_79 : f32 to vector<32x128xf32>
    %150 = arith.mulf %148, %149 : vector<32x128xf32>
    %151 = arith.addf %150, %1 : vector<32x128xf32>
    %cst_80 = arith.constant dense<0xFF800000> : vector<32xf32>
    %152 = vector.multi_reduction <maximumf>, %151, %cst_80 [1] : vector<32x128xf32> to vector<32xf32>
    %153 = vector.shape_cast %152 : vector<32xf32> to vector<32x1xf32>
    %154 = vector.broadcast %153 : vector<32x1xf32> to vector<32x128xf32>
    %155 = arith.subf %151, %154 : vector<32x128xf32>
    %156 = math.exp %155 : vector<32x128xf32>
    %cst_81 = arith.constant dense<0.000000e+00> : vector<32x128xf32>
    %157 = tpu.matmul %156, %2, %cst_81 {dimension_numbers = #tpu.dot_dimension_numbers<[1], [0], [0], [1], [0, 0, 1, 1], [], []>} : vector<32x128xf32>, vector<128x128xf32>, vector<32x128xf32> -> vector<32x128xf32>
    %158 = tpu.reciprocal %157 {approx = true} : vector<32x128xf32> -> vector<32x128xf32>
    %159 = arith.mulf %156, %158 : vector<32x128xf32>
    %160 = arith.truncf %159 : vector<32x128xf32> to vector<32x128xbf16>
    %161 = arith.truncf %145 : vector<128x32xf32> to vector<128x32xbf16>
    %cst_82 = arith.constant dense<0.000000e+00> : vector<32x32xf32>
    %162 = tpu.matmul %160, %161, %cst_82 {dimension_numbers = #tpu.dot_dimension_numbers<[1], [0], [0], [1], [0, 0, 1, 1], [], []>} : vector<32x128xbf16>, vector<128x32xbf16>, vector<32x32xf32> -> vector<32x32xf32>
    %163 = arith.truncf %162 : vector<32x32xf32> to vector<32x32xbf16>
    %c1_83 = arith.constant 1 : index
    %c0_84 = arith.constant 0 : index
    %c0_85 = arith.constant 0 : index
    %164 = vector.load %arg7[%c1_83, %c0_84, %c0_85] : memref<2x32x32xbf16, #tpu.memory_space<vmem>>, vector<1x32x32xbf16>
    %165 = vector.shape_cast %164 : vector<1x32x32xbf16> to vector<32x32xbf16>
    %cst_86 = arith.constant dense<0.000000e+00> : vector<32x32xf32>
    %166 = tpu.matmul %163, %165, %cst_86 {dimension_numbers = #tpu.dot_dimension_numbers<[1], [0], [0], [1], [0, 0, 1, 1], [], []>} : vector<32x32xbf16>, vector<32x32xbf16>, vector<32x32xf32> -> vector<32x32xf32>
    %c1_87 = arith.constant 1 : index
    %c0_88 = arith.constant 0 : index
    %c0_89 = arith.constant 0 : index
    %167 = vector.load %arg8[%c1_87, %c0_88, %c0_89] : memref<2x1x32xf32, #tpu.memory_space<vmem>>, vector<1x1x32xf32>
    %168 = vector.shape_cast %167 : vector<1x1x32xf32> to vector<1x32xf32>
    %169 = vector.broadcast %168 : vector<1x32xf32> to vector<32x32xf32>
    %170 = arith.addf %166, %169 : vector<32x32xf32>
    %171 = arith.addf %130, %170 : vector<32x32xf32>
    %c1_90 = arith.constant 1 : index
    %c0_91 = arith.constant 0 : index
    %c0_92 = arith.constant 0 : index
    %172 = vector.load %arg9[%c1_90, %c0_91, %c0_92] : memref<2x1x32xf32, #tpu.memory_space<vmem>>, vector<1x1x32xf32>
    %173 = vector.shape_cast %172 : vector<1x1x32xf32> to vector<1x32xf32>
    %c1_93 = arith.constant 1 : index
    %c0_94 = arith.constant 0 : index
    %c0_95 = arith.constant 0 : index
    %174 = vector.load %arg10[%c1_93, %c0_94, %c0_95] : memref<2x1x32xf32, #tpu.memory_space<vmem>>, vector<1x1x32xf32>
    %175 = vector.shape_cast %174 : vector<1x1x32xf32> to vector<1x32xf32>
    %cst_96 = arith.constant dense<0.000000e+00> : vector<32xf32>
    %176 = vector.multi_reduction <add>, %171, %cst_96 [1] : vector<32x32xf32> to vector<32xf32>
    %177 = vector.shape_cast %176 : vector<32xf32> to vector<32x1xf32>
    %cst_97 = arith.constant 3.200000e+01 : f32
    %178 = vector.broadcast %cst_97 : f32 to vector<32x1xf32>
    %179 = arith.divf %177, %178 : vector<32x1xf32>
    %180 = vector.broadcast %179 : vector<32x1xf32> to vector<32x32xf32>
    %181 = arith.subf %171, %180 : vector<32x32xf32>
    %182 = arith.mulf %181, %181 : vector<32x32xf32>
    %cst_98 = arith.constant dense<0.000000e+00> : vector<32xf32>
    %183 = vector.multi_reduction <add>, %182, %cst_98 [1] : vector<32x32xf32> to vector<32xf32>
    %184 = vector.shape_cast %183 : vector<32xf32> to vector<32x1xf32>
    %cst_99 = arith.constant 3.200000e+01 : f32
    %185 = vector.broadcast %cst_99 : f32 to vector<32x1xf32>
    %186 = arith.divf %184, %185 : vector<32x1xf32>
    %cst_100 = arith.constant 9.99999974E-6 : f32
    %187 = vector.broadcast %cst_100 : f32 to vector<32x1xf32>
    %188 = arith.addf %186, %187 : vector<32x1xf32>
    %189 = math.rsqrt %188 : vector<32x1xf32>
    %190 = vector.broadcast %189 : vector<32x1xf32> to vector<32x32xf32>
    %191 = arith.mulf %181, %190 : vector<32x32xf32>
    %192 = vector.broadcast %173 : vector<1x32xf32> to vector<32x32xf32>
    %193 = arith.mulf %191, %192 : vector<32x32xf32>
    %194 = vector.broadcast %175 : vector<1x32xf32> to vector<32x32xf32>
    %195 = arith.addf %193, %194 : vector<32x32xf32>
    %196 = arith.truncf %195 : vector<32x32xf32> to vector<32x32xbf16>
    %c1_101 = arith.constant 1 : index
    %c0_102 = arith.constant 0 : index
    %c0_103 = arith.constant 0 : index
    %197 = vector.load %arg11[%c1_101, %c0_102, %c0_103] : memref<2x32x128xbf16, #tpu.memory_space<vmem>>, vector<1x32x128xbf16>
    %198 = vector.shape_cast %197 : vector<1x32x128xbf16> to vector<32x128xbf16>
    %cst_104 = arith.constant dense<0.000000e+00> : vector<32x128xf32>
    %199 = tpu.matmul %196, %198, %cst_104 {dimension_numbers = #tpu.dot_dimension_numbers<[1], [0], [0], [1], [0, 0, 1, 1], [], []>} : vector<32x32xbf16>, vector<32x128xbf16>, vector<32x128xf32> -> vector<32x128xf32>
    %c1_105 = arith.constant 1 : index
    %c0_106 = arith.constant 0 : index
    %c0_107 = arith.constant 0 : index
    %200 = vector.load %arg12[%c1_105, %c0_106, %c0_107] : memref<2x1x128xf32, #tpu.memory_space<vmem>>, vector<1x1x128xf32>
    %201 = vector.shape_cast %200 : vector<1x1x128xf32> to vector<1x128xf32>
    %202 = vector.broadcast %201 : vector<1x128xf32> to vector<32x128xf32>
    %203 = arith.addf %199, %202 : vector<32x128xf32>
    %204 = arith.mulf %203, %203 : vector<32x128xf32>
    %205 = arith.mulf %203, %204 : vector<32x128xf32>
    %cst_108 = arith.constant 4.471500e-02 : f32
    %206 = vector.broadcast %cst_108 : f32 to vector<32x128xf32>
    %207 = arith.mulf %206, %205 : vector<32x128xf32>
    %208 = arith.addf %203, %207 : vector<32x128xf32>
    %cst_109 = arith.constant 0.797884583 : f32
    %209 = vector.broadcast %cst_109 : f32 to vector<32x128xf32>
    %210 = arith.mulf %209, %208 : vector<32x128xf32>
    %211 = math.tanh %210 : vector<32x128xf32>
    %cst_110 = arith.constant 1.000000e+00 : f32
    %212 = vector.broadcast %cst_110 : f32 to vector<32x128xf32>
    %213 = arith.addf %212, %211 : vector<32x128xf32>
    %cst_111 = arith.constant 5.000000e-01 : f32
    %214 = vector.broadcast %cst_111 : f32 to vector<32x128xf32>
    %215 = arith.mulf %214, %213 : vector<32x128xf32>
    %216 = arith.mulf %203, %215 : vector<32x128xf32>
    %217 = arith.truncf %216 : vector<32x128xf32> to vector<32x128xbf16>
    %c1_112 = arith.constant 1 : index
    %c0_113 = arith.constant 0 : index
    %c0_114 = arith.constant 0 : index
    %218 = vector.load %arg13[%c1_112, %c0_113, %c0_114] : memref<2x128x32xbf16, #tpu.memory_space<vmem>>, vector<1x128x32xbf16>
    %219 = vector.shape_cast %218 : vector<1x128x32xbf16> to vector<128x32xbf16>
    %cst_115 = arith.constant dense<0.000000e+00> : vector<32x32xf32>
    %220 = tpu.matmul %217, %219, %cst_115 {dimension_numbers = #tpu.dot_dimension_numbers<[1], [0], [0], [1], [0, 0, 1, 1], [], []>} : vector<32x128xbf16>, vector<128x32xbf16>, vector<32x32xf32> -> vector<32x32xf32>
    %c1_116 = arith.constant 1 : index
    %c0_117 = arith.constant 0 : index
    %c0_118 = arith.constant 0 : index
    %221 = vector.load %arg14[%c1_116, %c0_117, %c0_118] : memref<2x1x32xf32, #tpu.memory_space<vmem>>, vector<1x1x32xf32>
    %222 = vector.shape_cast %221 : vector<1x1x32xf32> to vector<1x32xf32>
    %223 = vector.broadcast %222 : vector<1x32xf32> to vector<32x32xf32>
    %224 = arith.addf %220, %223 : vector<32x32xf32>
    %225 = arith.addf %195, %224 : vector<32x32xf32>
    %c1_119 = arith.constant 1 : index
    %c0_120 = arith.constant 0 : index
    %c0_121 = arith.constant 0 : index
    %226 = vector.load %arg15[%c1_119, %c0_120, %c0_121] : memref<2x1x32xf32, #tpu.memory_space<vmem>>, vector<1x1x32xf32>
    %227 = vector.shape_cast %226 : vector<1x1x32xf32> to vector<1x32xf32>
    %c1_122 = arith.constant 1 : index
    %c0_123 = arith.constant 0 : index
    %c0_124 = arith.constant 0 : index
    %228 = vector.load %arg16[%c1_122, %c0_123, %c0_124] : memref<2x1x32xf32, #tpu.memory_space<vmem>>, vector<1x1x32xf32>
    %229 = vector.shape_cast %228 : vector<1x1x32xf32> to vector<1x32xf32>
    %cst_125 = arith.constant dense<0.000000e+00> : vector<32xf32>
    %230 = vector.multi_reduction <add>, %225, %cst_125 [1] : vector<32x32xf32> to vector<32xf32>
    %231 = vector.shape_cast %230 : vector<32xf32> to vector<32x1xf32>
    %cst_126 = arith.constant 3.200000e+01 : f32
    %232 = vector.broadcast %cst_126 : f32 to vector<32x1xf32>
    %233 = arith.divf %231, %232 : vector<32x1xf32>
    %234 = vector.broadcast %233 : vector<32x1xf32> to vector<32x32xf32>
    %235 = arith.subf %225, %234 : vector<32x32xf32>
    %236 = arith.mulf %235, %235 : vector<32x32xf32>
    %cst_127 = arith.constant dense<0.000000e+00> : vector<32xf32>
    %237 = vector.multi_reduction <add>, %236, %cst_127 [1] : vector<32x32xf32> to vector<32xf32>
    %238 = vector.shape_cast %237 : vector<32xf32> to vector<32x1xf32>
    %cst_128 = arith.constant 3.200000e+01 : f32
    %239 = vector.broadcast %cst_128 : f32 to vector<32x1xf32>
    %240 = arith.divf %238, %239 : vector<32x1xf32>
    %cst_129 = arith.constant 9.99999974E-6 : f32
    %241 = vector.broadcast %cst_129 : f32 to vector<32x1xf32>
    %242 = arith.addf %240, %241 : vector<32x1xf32>
    %243 = math.rsqrt %242 : vector<32x1xf32>
    %244 = vector.broadcast %243 : vector<32x1xf32> to vector<32x32xf32>
    %245 = arith.mulf %235, %244 : vector<32x32xf32>
    %246 = vector.broadcast %227 : vector<1x32xf32> to vector<32x32xf32>
    %247 = arith.mulf %245, %246 : vector<32x32xf32>
    %248 = vector.broadcast %229 : vector<1x32xf32> to vector<32x32xf32>
    %249 = arith.addf %247, %248 : vector<32x32xf32>
    %250 = arith.truncf %249 : vector<32x32xf32> to vector<32x32xbf16>
    %c0_130 = arith.constant 0 : index
    %c0_131 = arith.constant 0 : index
    %251 = vector.load %arg17[%c0_130, %c0_131] : memref<32x256xbf16, #tpu.memory_space<vmem>>, vector<32x256xbf16>
    %cst_132 = arith.constant dense<0.000000e+00> : vector<32x256xf32>
    %252 = tpu.matmul %250, %251, %cst_132 {dimension_numbers = #tpu.dot_dimension_numbers<[1], [0], [0], [1], [0, 0, 1, 1], [], []>} : vector<32x32xbf16>, vector<32x256xbf16>, vector<32x256xf32> -> vector<32x256xf32>
    %c0_133 = arith.constant 0 : index
    %c0_134 = arith.constant 0 : index
    %253 = vector.load %arg18[%c0_133, %c0_134] : memref<1x256xf32, #tpu.memory_space<vmem>>, vector<1x256xf32>
    %254 = vector.broadcast %253 : vector<1x256xf32> to vector<32x256xf32>
    %255 = arith.addf %252, %254 : vector<32x256xf32>
    %cst_135 = arith.constant 0.000000e+00 : f32
    %256 = vector.broadcast %cst_135 : f32 to vector<32x256xf32>
    %257 = arith.maximumf %255, %256 : vector<32x256xf32>
    %258 = arith.truncf %257 : vector<32x256xf32> to vector<32x256xbf16>
    %c0_136 = arith.constant 0 : index
    %c0_137 = arith.constant 0 : index
    %259 = vector.load %arg19[%c0_136, %c0_137] : memref<256x64xbf16, #tpu.memory_space<vmem>>, vector<256x64xbf16>
    %cst_138 = arith.constant dense<0.000000e+00> : vector<32x64xf32>
    %260 = tpu.matmul %258, %259, %cst_138 {dimension_numbers = #tpu.dot_dimension_numbers<[1], [0], [0], [1], [0, 0, 1, 1], [], []>} : vector<32x256xbf16>, vector<256x64xbf16>, vector<32x64xf32> -> vector<32x64xf32>
    %c0_139 = arith.constant 0 : index
    %c0_140 = arith.constant 0 : index
    %261 = vector.load %arg20[%c0_139, %c0_140] : memref<1x64xf32, #tpu.memory_space<vmem>>, vector<1x64xf32>
    %262 = vector.broadcast %261 : vector<1x64xf32> to vector<32x64xf32>
    %263 = arith.addf %260, %262 : vector<32x64xf32>
    %c0_141 = arith.constant 0 : index
    %c0_142 = arith.constant 0 : index
    %264 = vector.load %arg24[%c0_141, %c0_142] : memref<32x64xf32, #tpu.memory_space<vmem>>, vector<32x64xf32>
    tpu.vector_store %arg24[%c0_141, %c0_142], %263 {strides = array<i32>} : memref<32x64xf32, #tpu.memory_space<vmem>>, vector<32x64xf32>,
    return
  }
  func.func @transform_0(%arg0: i32) -> (i32, i32) {
    %c0_i32 = arith.constant 0 : i32
    %c0_i32_0 = arith.constant 0 : i32
    return %arg0, %c0_i32 : i32, i32
  }
  func.func @transform_1(%arg0: i32) -> (i32, i32) {
    %c0_i32 = arith.constant 0 : i32
    %c0_i32_0 = arith.constant 0 : i32
    %c0_i32_1 = arith.constant 0 : i32
    return %c0_i32, %c0_i32_0 : i32, i32
  }
  func.func @transform_2(%arg0: i32) -> (i32, i32) {
    %c0_i32 = arith.constant 0 : i32
    %c0_i32_0 = arith.constant 0 : i32
    %c0_i32_1 = arith.constant 0 : i32
    return %c0_i32, %c0_i32_0 : i32, i32
  }
  func.func @transform_3(%arg0: i32) -> (i32, i32) {
    %c0_i32 = arith.constant 0 : i32
    %c0_i32_0 = arith.constant 0 : i32
    %c0_i32_1 = arith.constant 0 : i32
    return %c0_i32, %c0_i32_0 : i32, i32
  }
  func.func @transform_4(%arg0: i32) -> (i32, i32, i32) {
    %c0_i32 = arith.constant 0 : i32
    %c0_i32_0 = arith.constant 0 : i32
    %c0_i32_1 = arith.constant 0 : i32
    %c0_i32_2 = arith.constant 0 : i32
    return %c0_i32, %c0_i32_0, %c0_i32_1 : i32, i32, i32
  }
  func.func @transform_5(%arg0: i32) -> (i32, i32, i32) {
    %c0_i32 = arith.constant 0 : i32
    %c0_i32_0 = arith.constant 0 : i32
    %c0_i32_1 = arith.constant 0 : i32
    %c0_i32_2 = arith.constant 0 : i32
    return %c0_i32, %c0_i32_0, %c0_i32_1 : i32, i32, i32
  }
  func.func @transform_6(%arg0: i32) -> (i32, i32, i32) {
    %c0_i32 = arith.constant 0 : i32
    %c0_i32_0 = arith.constant 0 : i32
    %c0_i32_1 = arith.constant 0 : i32
    %c0_i32_2 = arith.constant 0 : i32
    return %c0_i32, %c0_i32_0, %c0_i32_1 : i32, i32, i32
  }
  func.func @transform_7(%arg0: i32) -> (i32, i32, i32) {
    %c0_i32 = arith.constant 0 : i32
    %c0_i32_0 = arith.constant 0 : i32
    %c0_i32_1 = arith.constant 0 : i32
    %c0_i32_2 = arith.constant 0 : i32
    return %c0_i32, %c0_i32_0, %c0_i32_1 : i32, i32, i32
  }
  func.func @transform_8(%arg0: i32) -> (i32, i32, i32) {
    %c0_i32 = arith.constant 0 : i32
    %c0_i32_0 = arith.constant 0 : i32
    %c0_i32_1 = arith.constant 0 : i32
    %c0_i32_2 = arith.constant 0 : i32
    return %c0_i32, %c0_i32_0, %c0_i32_1 : i32, i32, i32
  }
  func.func @transform_9(%arg0: i32) -> (i32, i32, i32) {
    %c0_i32 = arith.constant 0 : i32
    %c0_i32_0 = arith.constant 0 : i32
    %c0_i32_1 = arith.constant 0 : i32
    %c0_i32_2 = arith.constant 0 : i32
    return %c0_i32, %c0_i32_0, %c0_i32_1 : i32, i32, i32
  }
  func.func @transform_10(%arg0: i32) -> (i32, i32, i32) {
    %c0_i32 = arith.constant 0 : i32
    %c0_i32_0 = arith.constant 0 : i32
    %c0_i32_1 = arith.constant 0 : i32
    %c0_i32_2 = arith.constant 0 : i32
    return %c0_i32, %c0_i32_0, %c0_i32_1 : i32, i32, i32
  }
  func.func @transform_11(%arg0: i32) -> (i32, i32, i32) {
    %c0_i32 = arith.constant 0 : i32
    %c0_i32_0 = arith.constant 0 : i32
    %c0_i32_1 = arith.constant 0 : i32
    %c0_i32_2 = arith.constant 0 : i32
    return %c0_i32, %c0_i32_0, %c0_i32_1 : i32, i32, i32
  }
  func.func @transform_12(%arg0: i32) -> (i32, i32, i32) {
    %c0_i32 = arith.constant 0 : i32
    %c0_i32_0 = arith.constant 0 : i32
    %c0_i32_1 = arith.constant 0 : i32
    %c0_i32_2 = arith.constant 0 : i32
    return %c0_i32, %c0_i32_0, %c0_i32_1 : i32, i32, i32
  }
  func.func @transform_13(%arg0: i32) -> (i32, i32, i32) {
    %c0_i32 = arith.constant 0 : i32
    %c0_i32_0 = arith.constant 0 : i32
    %c0_i32_1 = arith.constant 0 : i32
    %c0_i32_2 = arith.constant 0 : i32
    return %c0_i32, %c0_i32_0, %c0_i32_1 : i32, i32, i32
  }
  func.func @transform_14(%arg0: i32) -> (i32, i32, i32) {
    %c0_i32 = arith.constant 0 : i32
    %c0_i32_0 = arith.constant 0 : i32
    %c0_i32_1 = arith.constant 0 : i32
    %c0_i32_2 = arith.constant 0 : i32
    return %c0_i32, %c0_i32_0, %c0_i32_1 : i32, i32, i32
  }
  func.func @transform_15(%arg0: i32) -> (i32, i32, i32) {
    %c0_i32 = arith.constant 0 : i32
    %c0_i32_0 = arith.constant 0 : i32
    %c0_i32_1 = arith.constant 0 : i32
    %c0_i32_2 = arith.constant 0 : i32
    return %c0_i32, %c0_i32_0, %c0_i32_1 : i32, i32, i32
  }
  func.func @transform_16(%arg0: i32) -> (i32, i32) {
    %c0_i32 = arith.constant 0 : i32
    %c0_i32_0 = arith.constant 0 : i32
    %c0_i32_1 = arith.constant 0 : i32
    return %c0_i32, %c0_i32_0 : i32, i32
  }
  func.func @transform_17(%arg0: i32) -> (i32, i32) {
    %c0_i32 = arith.constant 0 : i32
    %c0_i32_0 = arith.constant 0 : i32
    %c0_i32_1 = arith.constant 0 : i32
    return %c0_i32, %c0_i32_0 : i32, i32
  }
  func.func @transform_18(%arg0: i32) -> (i32, i32) {
    %c0_i32 = arith.constant 0 : i32
    %c0_i32_0 = arith.constant 0 : i32
    %c0_i32_1 = arith.constant 0 : i32
    return %c0_i32, %c0_i32_0 : i32, i32
  }
  func.func @transform_19(%arg0: i32) -> (i32, i32) {
    %c0_i32 = arith.constant 0 : i32
    %c0_i32_0 = arith.constant 0 : i32
    %c0_i32_1 = arith.constant 0 : i32
    return %c0_i32, %c0_i32_0 : i32, i32
  }
  func.func @transform_20(%arg0: i32) -> (i32, i32) {
    %c0_i32 = arith.constant 0 : i32
    %c0_i32_0 = arith.constant 0 : i32
    %c0_i32_1 = arith.constant 0 : i32
    return %c0_i32, %c0_i32_0 : i32, i32
  }
  func.func @transform_21(%arg0: i32) -> (i32, i32) {
    %c0_i32 = arith.constant 0 : i32
    %c0_i32_0 = arith.constant 0 : i32
    %c0_i32_1 = arith.constant 0 : i32
    return %c0_i32, %c0_i32_0 : i32, i32
  }
  func.func @transform_22(%arg0: i32) -> (i32, i32) {
    %c0_i32 = arith.constant 0 : i32
    %c0_i32_0 = arith.constant 0 : i32
    %c0_i32_1 = arith.constant 0 : i32
    return %c0_i32, %c0_i32_0 : i32, i32
  }
  func.func @transform_23(%arg0: i32) -> (i32, i32) {
    %c0_i32 = arith.constant 0 : i32
    %c0_i32_0 = arith.constant 0 : i32
    return %arg0, %c0_i32 : i32, i32
  }
}

</mosaic_0001>

<llo_original>
// kernel: small_vit_forward.1
$region0: #{small_vit_forward.1}
  #allocation0 [shape = 'u32[]', space=smem, size = 0x4, offset = 0x4, fixed_abs, tag = 'smem constant byte address 0x4 - core index']
  #allocation1 [shape = 'u32[72,128]{1,0:T(1,128)}', space=vmem, size = 0x9000, scoped, tag = 'internal scratch']
  %s0 = inlined_call_operand.vmem [shape: f32[32,192], index: 0, kind: input, shape index: {}]
  %s1 = inlined_call_operand.vmem [shape: f32[32,32], index: 1, kind: input, shape index: {}]
  %s2 = inlined_call_operand.vmem [shape: bf16[192,32], index: 2, kind: input, shape index: {}]
  %s3 = inlined_call_operand.vmem [shape: f32[1,32], index: 3, kind: input, shape index: {}]
  %s4 = inlined_call_operand.vmem [shape: bf16[2,32,96], index: 4, kind: input, shape index: {}]
  %s5 = inlined_call_operand.vmem [shape: f32[2,1,96], index: 5, kind: input, shape index: {}]
  %s6 = inlined_call_operand.vmem [shape: bf16[2,32,32], index: 6, kind: input, shape index: {}]
  %s7 = inlined_call_operand.vmem [shape: f32[2,1,32], index: 7, kind: input, shape index: {}]
  %s8 = inlined_call_operand.vmem [shape: f32[2,1,32], index: 8, kind: input, shape index: {}]
  %s9 = inlined_call_operand.vmem [shape: f32[2,1,32], index: 9, kind: input, shape index: {}]
  %s10 = inlined_call_operand.vmem [shape: bf16[2,32,128], index: 10, kind: input, shape index: {}]
  %s11 = inlined_call_operand.vmem [shape: f32[2,1,128], index: 11, kind: input, shape index: {}]
  %s12 = inlined_call_operand.vmem [shape: bf16[2,128,32], index: 12, kind: input, shape index: {}]
  %s13 = inlined_call_operand.vmem [shape: f32[2,1,32], index: 13, kind: input, shape index: {}]
  %s14 = inlined_call_operand.vmem [shape: f32[2,1,32], index: 14, kind: input, shape index: {}]
  %s15 = inlined_call_operand.vmem [shape: f32[2,1,32], index: 15, kind: input, shape index: {}]
  %s16 = inlined_call_operand.vmem [shape: bf16[32,256], index: 16, kind: input, shape index: {}]
  %s17 = inlined_call_operand.vmem [shape: f32[1,256], index: 17, kind: input, shape index: {}]
  %s18 = inlined_call_operand.vmem [shape: bf16[256,64], index: 18, kind: input, shape index: {}]
  %s19 = inlined_call_operand.vmem [shape: f32[1,64], index: 19, kind: input, shape index: {}]
  %s20 = inlined_call_operand.vmem [shape: f32[128,32], index: 20, kind: input, shape index: {}]
  %s21 = inlined_call_operand.vmem [shape: f32[32,128], index: 21, kind: input, shape index: {}]
  %s22 = inlined_call_operand.vmem [shape: f32[128,128], index: 22, kind: input, shape index: {}]
  %s23 = inlined_call_operand.vmem [shape: f32[32,64], index: 23, kind: output, shape index: {}]
  %s24 = sld [smem:[#allocation0]]
  $region102: #{small_vit_forward.1} parent=0
    _
  %s26 = ssub.s32 1, %s24
  %s27 = scalar_select 0, %s26, %s24
  // Predicated region
  $region2: #{small_vit_forward.1} parent=0 // pred_check
    _
  $region3: #{small_vit_forward.1} parent=0 // pred_check_branch
    %29 = sbr.rel (0) target = $region5
  $region4: #{small_vit_forward.1} parent=0 // pred_region
    _
  $region5: #{small_vit_forward.1} parent=0 // pred_fallthru
    _
  // Predicated region
  $region6: #{small_vit_forward.1} parent=0 // pred_check
    _
  $region7: #{small_vit_forward.1} parent=0 // pred_check_branch
    %31 = sbr.rel (0) target = $region9
  $region8: #{small_vit_forward.1} parent=0 // pred_region
    _
  $region9: #{small_vit_forward.1} parent=0 // pred_fallthru
    _
  // Predicated region
  $region10: #{small_vit_forward.1} parent=0 // pred_check
    _
  $region11: #{small_vit_forward.1} parent=0 // pred_check_branch
    %33 = sbr.rel (0) target = $region13
  $region12: #{small_vit_forward.1} parent=0 // pred_region
    _
  $region13: #{small_vit_forward.1} parent=0 // pred_fallthru
    _
  // Predicated region
  $region14: #{small_vit_forward.1} parent=0 // pred_check
    _
  $region15: #{small_vit_forward.1} parent=0 // pred_check_branch
    %35 = sbr.rel (0) target = $region17
  $region16: #{small_vit_forward.1} parent=0 // pred_region
    _
  $region17: #{small_vit_forward.1} parent=0 // pred_fallthru
    _
  // Predicated region
  $region18: #{small_vit_forward.1} parent=0 // pred_check
    _
  $region19: #{small_vit_forward.1} parent=0 // pred_check_branch
    %37 = sbr.rel (0) target = $region21
  $region20: #{small_vit_forward.1} parent=0 // pred_region
    _
  $region21: #{small_vit_forward.1} parent=0 // pred_fallthru
    _
  // Predicated region
  $region22: #{small_vit_forward.1} parent=0 // pred_check
    _
  $region23: #{small_vit_forward.1} parent=0 // pred_check_branch
    %39 = sbr.rel (0) target = $region25
  $region24: #{small_vit_forward.1} parent=0 // pred_region
    _
  $region25: #{small_vit_forward.1} parent=0 // pred_fallthru
    _
  // Predicated region
  $region26: #{small_vit_forward.1} parent=0 // pred_check
    _
  $region27: #{small_vit_forward.1} parent=0 // pred_check_branch
    %41 = sbr.rel (0) target = $region29
  $region28: #{small_vit_forward.1} parent=0 // pred_region
    _
  $region29: #{small_vit_forward.1} parent=0 // pred_fallthru
    _
  // Predicated region
  $region30: #{small_vit_forward.1} parent=0 // pred_check
    _
  $region31: #{small_vit_forward.1} parent=0 // pred_check_branch
    %43 = sbr.rel (0) target = $region33
  $region32: #{small_vit_forward.1} parent=0 // pred_region
    _
  $region33: #{small_vit_forward.1} parent=0 // pred_fallthru
    _
  // Predicated region
  $region34: #{small_vit_forward.1} parent=0 // pred_check
    _
  $region35: #{small_vit_forward.1} parent=0 // pred_check_branch
    %45 = sbr.rel (0) target = $region37
  $region36: #{small_vit_forward.1} parent=0 // pred_region
    _
  $region37: #{small_vit_forward.1} parent=0 // pred_fallthru
    _
  // Predicated region
  $region38: #{small_vit_forward.1} parent=0 // pred_check
    _
  $region39: #{small_vit_forward.1} parent=0 // pred_check_branch
    %47 = sbr.rel (0) target = $region41
  $region40: #{small_vit_forward.1} parent=0 // pred_region
    _
  $region41: #{small_vit_forward.1} parent=0 // pred_fallthru
    _
  // Predicated region
  $region42: #{small_vit_forward.1} parent=0 // pred_check
    _
  $region43: #{small_vit_forward.1} parent=0 // pred_check_branch
    %49 = sbr.rel (0) target = $region45
  $region44: #{small_vit_forward.1} parent=0 // pred_region
    _
  $region45: #{small_vit_forward.1} parent=0 // pred_fallthru
    _
  // Predicated region
  $region46: #{small_vit_forward.1} parent=0 // pred_check
    _
  $region47: #{small_vit_forward.1} parent=0 // pred_check_branch
    %51 = sbr.rel (0) target = $region49
  $region48: #{small_vit_forward.1} parent=0 // pred_region
    _
  $region49: #{small_vit_forward.1} parent=0 // pred_fallthru
    _
  // Predicated region
  $region50: #{small_vit_forward.1} parent=0 // pred_check
    _
  $region51: #{small_vit_forward.1} parent=0 // pred_check_branch
    %53 = sbr.rel (0) target = $region53
  $region52: #{small_vit_forward.1} parent=0 // pred_region
    _
  $region53: #{small_vit_forward.1} parent=0 // pred_fallthru
    _
  // Predicated region
  $region54: #{small_vit_forward.1} parent=0 // pred_check
    _
  $region55: #{small_vit_forward.1} parent=0 // pred_check_branch
    %55 = sbr.rel (0) target = $region57
  $region56: #{small_vit_forward.1} parent=0 // pred_region
    _
  $region57: #{small_vit_forward.1} parent=0 // pred_fallthru
    _
  // Predicated region
  $region58: #{small_vit_forward.1} parent=0 // pred_check
    _
  $region59: #{small_vit_forward.1} parent=0 // pred_check_branch
    %57 = sbr.rel (0) target = $region61
  $region60: #{small_vit_forward.1} parent=0 // pred_region
    _
  $region61: #{small_vit_forward.1} parent=0 // pred_fallthru
    _
  // Predicated region
  $region62: #{small_vit_forward.1} parent=0 // pred_check
    _
  $region63: #{small_vit_forward.1} parent=0 // pred_check_branch
    %59 = sbr.rel (0) target = $region65
  $region64: #{small_vit_forward.1} parent=0 // pred_region
    _
  $region65: #{small_vit_forward.1} parent=0 // pred_fallthru
    _
  // Predicated region
  $region66: #{small_vit_forward.1} parent=0 // pred_check
    _
  $region67: #{small_vit_forward.1} parent=0 // pred_check_branch
    %61 = sbr.rel (0) target = $region69
  $region68: #{small_vit_forward.1} parent=0 // pred_region
    _
  $region69: #{small_vit_forward.1} parent=0 // pred_fallthru
    _
  // Predicated region
  $region70: #{small_vit_forward.1} parent=0 // pred_check
    _
  $region71: #{small_vit_forward.1} parent=0 // pred_check_branch
    %63 = sbr.rel (0) target = $region73
  $region72: #{small_vit_forward.1} parent=0 // pred_region
    _
  $region73: #{small_vit_forward.1} parent=0 // pred_fallthru
    _
  // Predicated region
  $region74: #{small_vit_forward.1} parent=0 // pred_check
    _
  $region75: #{small_vit_forward.1} parent=0 // pred_check_branch
    %65 = sbr.rel (0) target = $region77
  $region76: #{small_vit_forward.1} parent=0 // pred_region
    _
  $region77: #{small_vit_forward.1} parent=0 // pred_fallthru
    _
  // Predicated region
  $region78: #{small_vit_forward.1} parent=0 // pred_check
    _
  $region79: #{small_vit_forward.1} parent=0 // pred_check_branch
    %67 = sbr.rel (0) target = $region81
  $region80: #{small_vit_forward.1} parent=0 // pred_region
    _
  $region81: #{small_vit_forward.1} parent=0 // pred_fallthru
    _
  // Predicated region
  $region82: #{small_vit_forward.1} parent=0 // pred_check
    _
  $region83: #{small_vit_forward.1} parent=0 // pred_check_branch
    %69 = sbr.rel (0) target = $region85
  $region84: #{small_vit_forward.1} parent=0 // pred_region
    _
  $region85: #{small_vit_forward.1} parent=0 // pred_fallthru
    _
  // Predicated region
  $region86: #{small_vit_forward.1} parent=0 // pred_check
    _
  $region87: #{small_vit_forward.1} parent=0 // pred_check_branch
    %71 = sbr.rel (0) target = $region89
  $region88: #{small_vit_forward.1} parent=0 // pred_region
    _
  $region89: #{small_vit_forward.1} parent=0 // pred_fallthru
    _
  // Predicated region
  $region90: #{small_vit_forward.1} parent=0 // pred_check
    _
  $region91: #{small_vit_forward.1} parent=0 // pred_check_branch
    %73 = sbr.rel (0) target = $region93
  $region92: #{small_vit_forward.1} parent=0 // pred_region
    _
  $region93: #{small_vit_forward.1} parent=0 // pred_fallthru
    _
  %v75 = vld [vmem:[%s20] sm:$0xff]
  %v76 = vld [vmem:[%s20 + $0x8] sm:$0xff]
  %v77 = vld [vmem:[%s20 + $0x10] sm:$0xff]
  %v78 = vld [vmem:[%s20 + $0x18] sm:$0xff]
  %v79 = vld [vmem:[%s20 + $0x20] sm:$0xff]
  %v80 = vld [vmem:[%s20 + $0x28] sm:$0xff]
  %v81 = vld [vmem:[%s20 + $0x30] sm:$0xff]
  %v82 = vld [vmem:[%s20 + $0x38] sm:$0xff]
  %v83 = vld [vmem:[%s20 + $0x40] sm:$0xff]
  %v84 = vld [vmem:[%s20 + $0x48] sm:$0xff]
  %v85 = vld [vmem:[%s20 + $0x50] sm:$0xff]
  %v86 = vld [vmem:[%s20 + $0x58] sm:$0xff]
  %v87 = vld [vmem:[%s20 + $0x60] sm:$0xff]
  %v88 = vld [vmem:[%s20 + $0x68] sm:$0xff]
  %v89 = vld [vmem:[%s20 + $0x70] sm:$0xff]
  %v90 = vld [vmem:[%s20 + $0x78] sm:$0xff]
  %v91 = vld [vmem:[%s21] sm:$0xff]
  %v92 = vld [vmem:[%s21 + $0x8] sm:$0xff]
  %v93 = vld [vmem:[%s21 + $0x10] sm:$0xff]
  %v94 = vld [vmem:[%s21 + $0x18] sm:$0xff]
  %v95 = vld [vmem:[%s22] sm:$0xff]
  %v96 = vld [vmem:[%s22 + $0x8] sm:$0xff]
  %v97 = vld [vmem:[%s22 + $0x10] sm:$0xff]
  %v98 = vld [vmem:[%s22 + $0x18] sm:$0xff]
  %v99 = vld [vmem:[%s22 + $0x20] sm:$0xff]
  %v100 = vld [vmem:[%s22 + $0x28] sm:$0xff]
  %v101 = vld [vmem:[%s22 + $0x30] sm:$0xff]
  %v102 = vld [vmem:[%s22 + $0x38] sm:$0xff]
  %v103 = vld [vmem:[%s22 + $0x40] sm:$0xff]
  %v104 = vld [vmem:[%s22 + $0x48] sm:$0xff]
  %v105 = vld [vmem:[%s22 + $0x50] sm:$0xff]
  %v106 = vld [vmem:[%s22 + $0x58] sm:$0xff]
  %v107 = vld [vmem:[%s22 + $0x60] sm:$0xff]
  %v108 = vld [vmem:[%s22 + $0x68] sm:$0xff]
  %v109 = vld [vmem:[%s22 + $0x70] sm:$0xff]
  %v110 = vld [vmem:[%s22 + $0x78] sm:$0xff]
  %v111 = vld [vmem:[%s0] sm:$0xff]
  %v112 = vld [vmem:[%s0 + $0x8] sm:$0xff]
  %v113 = vld [vmem:[%s0 + $0x10] sm:$0xff]
  %v114 = vld [vmem:[%s0 + $0x18] sm:$0xff]
  %v115 = vld [vmem:[%s0 + $0x20] sm:$0xff]
  %v116 = vld [vmem:[%s0 + $0x28] sm:$0xff]
  %v117 = vld [vmem:[%s0 + $0x30] sm:$0xff]
  %v118 = vld [vmem:[%s0 + $0x38] sm:$0xff]
  %v119 = vpack.c.bf16 %v113, %v111
  %v120 = vpack.c.bf16 %v114, %v112
  %v121 = vpack.c.bf16 %v117, %v115
  %v122 = vpack.c.bf16 %v118, %v116
  %v123 = vld [vmem:[%s2] sm:$0xf]
  %v124 = vld [vmem:[%s2 + $0x4] sm:$0xf]
  %v125 = vld [vmem:[%s2 + $0x8] sm:$0xf]
  %v126 = vld [vmem:[%s2 + $0xc] sm:$0xf]
  %v127 = vld [vmem:[%s2 + $0x10] sm:$0xf]
  %v128 = vld [vmem:[%s2 + $0x14] sm:$0xf]
  %v129 = vld [vmem:[%s2 + $0x18] sm:$0xf]
  %v130 = vld [vmem:[%s2 + $0x1c] sm:$0xf]
  %v131 = vld [vmem:[%s2 + $0x20] sm:$0xf]
  %v132 = vld [vmem:[%s2 + $0x24] sm:$0xf]
  %v133 = vld [vmem:[%s2 + $0x28] sm:$0xf]
  %v134 = vld [vmem:[%s2 + $0x2c] sm:$0xf]
  %v135 = vld [vmem:[%s2 + $0x30] sm:$0xf]
  %v136 = vld [vmem:[%s2 + $0x34] sm:$0xf]
  %v137 = vld [vmem:[%s2 + $0x38] sm:$0xf]
  %v138 = vld [vmem:[%s2 + $0x3c] sm:$0xf]
  %v139 = vld [vmem:[%s2 + $0x40] sm:$0xf]
  %v140 = vld [vmem:[%s2 + $0x44] sm:$0xf]
  %v141 = vld [vmem:[%s2 + $0x48] sm:$0xf]
  %v142 = vld [vmem:[%s2 + $0x4c] sm:$0xf]
  %v143 = vld [vmem:[%s2 + $0x50] sm:$0xf]
  %v144 = vld [vmem:[%s2 + $0x54] sm:$0xf]
  %v145 = vld [vmem:[%s2 + $0x58] sm:$0xf]
  %v146 = vld [vmem:[%s2 + $0x5c] sm:$0xf]
  %v147 = vld [vmem:[%s3] sm:$0x1]
  %v149 = vperm.slane %v147, 0
  %v175 = vunpack.c.l.b16 %v123
  %v176 = vunpack.c.l.b16 %v124
  %v177 = vunpack.c.l.b16 %v125
  %v178 = vunpack.c.l.b16 %v126
  %v179 = vunpack.c.l.b16 %v127
  %v180 = vunpack.c.l.b16 %v128
  %v181 = vunpack.c.l.b16 %v129
  %v182 = vunpack.c.l.b16 %v130
  %v183 = vunpack.c.l.b16 %v131
  %v184 = vunpack.c.l.b16 %v132
  %v185 = vunpack.c.l.b16 %v133
  %v186 = vunpack.c.l.b16 %v134
  %v187 = vunpack.c.l.b16 %v135
  %v188 = vunpack.c.l.b16 %v136
  %v189 = vunpack.c.l.b16 %v137
  %v190 = vunpack.c.l.b16 %v138
  %v191 = vunpack.c.l.b16 %v139
  %v192 = vunpack.c.l.b16 %v140
  %v193 = vunpack.c.l.b16 %v141
  %v194 = vunpack.c.l.b16 %v142
  %v195 = vunpack.c.l.b16 %v143
  %v196 = vunpack.c.l.b16 %v144
  %v197 = vunpack.c.l.b16 %v145
  %v198 = vunpack.c.l.b16 %v146
  %v199 = vpack.c.b16 %v176, %v175
  %v200 = vpack.c.b16 %v178, %v177
  %v201 = vpack.c.b16 %v180, %v179
  %v202 = vpack.c.b16 %v182, %v181
  %v203 = vpack.c.b16 %v184, %v183
  %v204 = vpack.c.b16 %v186, %v185
  %v205 = vpack.c.b16 %v188, %v187
  %v206 = vpack.c.b16 %v190, %v189
  %v207 = vpack.c.b16 %v192, %v191
  %v208 = vpack.c.b16 %v194, %v193
  %v209 = vpack.c.b16 %v196, %v195
  %v210 = vpack.c.b16 %v198, %v197
  %vm223 = vcmask 523264
  %v225 = vsel %vm223, %v120, 0
  %v228 = vsel %vm223, %v122, 0
  %230 = vmatpush.bf16.msra.mxu0 %v206
  %231 = vmatpush.bf16.msra.mxu0 %v205
  %232 = vmatpush.bf16.msra.mxu0 %v204
  %233 = vmatpush.bf16.msra.mxu0 %v203
  %234 = vmatpush.bf16.msra.mxu0 %v202
  %235 = vmatpush.bf16.msra.mxu0 %v201
  %236 = vmatpush.bf16.msra.mxu0 %v200
  %237 = vmatpush.bf16.msra.mxu0 %v199
  %238 = vmatmul.bf16.gmra.mxu0 %v119
  %v239 = vpop.f32.mrf.mxu0
  %v240 = vadd.f32 %v149, %v239
  %v241 = vpop.f32.mrf.mxu0
  %v242 = vadd.f32 %v149, %v241
  %243 = vmatmul.bf16.gmra.mxu0 %v121
  %v244 = vpop.f32.mrf.mxu0
  %v245 = vadd.f32 %v149, %v244
  %v246 = vpop.f32.mrf.mxu0
  %v247 = vadd.f32 %v149, %v246
  %248 = vdwg.mxu0
  %249 = vmatpush.bf16.msra.mxu0 0
  %250 = vmatpush.bf16.msra.mxu0 0
  %251 = vmatpush.bf16.msra.mxu0 0
  %252 = vmatpush.bf16.msra.mxu0 0
  %253 = vmatpush.bf16.msra.mxu0 %v210
  %254 = vmatpush.bf16.msra.mxu0 %v209
  %255 = vmatpush.bf16.msra.mxu0 %v208
  %256 = vmatpush.bf16.msra.mxu0 %v207
  %257 = vmatmul.bf16.gmra.mxu0 %v225
  %v258 = vpop.f32.mrf.mxu0
  %v259 = vadd.f32 %v240, %v258
  %v260 = vpop.f32.mrf.mxu0
  %v261 = vadd.f32 %v242, %v260
  %262 = vmatmul.bf16.gmra.mxu0 %v228
  %v263 = vpop.f32.mrf.mxu0
  %v264 = vadd.f32 %v245, %v263
  %v265 = vpop.f32.mrf.mxu0
  %v266 = vadd.f32 %v247, %v265
  %267 = vdwg.mxu0
  %v268 = vld [vmem:[%s1] sm:$0xff]
  %v269 = vld [vmem:[%s1 + $0x8] sm:$0xff]
  %v270 = vld [vmem:[%s1 + $0x10] sm:$0xff]
  %v271 = vld [vmem:[%s1 + $0x18] sm:$0xff]
  %v272 = vadd.f32 %v259, %v268
  %v273 = vadd.f32 %v261, %v269
  %v274 = vadd.f32 %v264, %v270
  %v275 = vadd.f32 %v266, %v271
  %v276 = vpack.c.bf16 %v273, %v272
  %v277 = vpack.c.bf16 %v275, %v274
  %v278 = vld [vmem:[%s4] sm:$0xf]
  %v279 = vld [vmem:[%s4 + $0x4] sm:$0xf]
  %v280 = vld [vmem:[%s4 + $0x8] sm:$0xf]
  %v281 = vld [vmem:[%s4 + $0xc] sm:$0xf]
  %v282 = vld [vmem:[%s5] sm:$0x1]
  %v284 = vperm.slane %v282, 0
  %v290 = vunpack.c.l.b16 %v278
  %v291 = vunpack.c.l.b16 %v279
  %v292 = vunpack.c.l.b16 %v280
  %v293 = vunpack.c.l.b16 %v281
  %v294 = vpack.c.b16 %v291, %v290
  %v295 = vpack.c.b16 %v293, %v292
  %vm298 = vcmask 261120
  %v300 = vsel %vm298, %v276, 0
  %v303 = vsel %vm298, %v277, 0
  %305 = vmatpush.bf16.msra.mxu0 0
  %306 = vmatpush.bf16.msra.mxu0 0
  %307 = vmatpush.bf16.msra.mxu0 0
  %308 = vmatpush.bf16.msra.mxu0 0
  %309 = vmatpush.bf16.msra.mxu0 0
  %310 = vmatpush.bf16.msra.mxu0 0
  %311 = vmatpush.bf16.msra.mxu0 %v295
  %312 = vmatpush.bf16.msra.mxu0 %v294
  %313 = vmatmul.bf16.gmra.mxu0 %v300
  %v314 = vpop.f32.mrf.mxu0
  %v315 = vadd.f32 %v284, %v314
  %v316 = vpop.f32.mrf.mxu0
  %v317 = vadd.f32 %v284, %v316
  %318 = vmatmul.bf16.gmra.mxu0 %v303
  %v319 = vpop.f32.mrf.mxu0
  %v320 = vadd.f32 %v284, %v319
  %v321 = vpop.f32.mrf.mxu0
  %v322 = vadd.f32 %v284, %v321
  %323 = vdwg.mxu0
  %340 = vrot.lane.b32.xlu0 %v75, 32
  %v341 = vpop.permute.xlu0 %340
  %342 = vrot.lane.b32.xlu0 %v76, 32
  %v343 = vpop.permute.xlu0 %342
  %344 = vrot.lane.b32.xlu0 %v77, 32
  %v345 = vpop.permute.xlu0 %344
  %346 = vrot.lane.b32.xlu0 %v78, 32
  %v347 = vpop.permute.xlu0 %346
  %348 = vrot.lane.b32.xlu0 %v79, 32
  %v349 = vpop.permute.xlu0 %348
  %350 = vrot.lane.b32.xlu0 %v80, 32
  %v351 = vpop.permute.xlu0 %350
  %352 = vrot.lane.b32.xlu0 %v81, 32
  %v353 = vpop.permute.xlu0 %352
  %354 = vrot.lane.b32.xlu0 %v82, 32
  %v355 = vpop.permute.xlu0 %354
  %356 = vrot.lane.b32.xlu0 %v83, 32
  %v357 = vpop.permute.xlu0 %356
  %358 = vrot.lane.b32.xlu0 %v84, 32
  %v359 = vpop.permute.xlu0 %358
  %360 = vrot.lane.b32.xlu0 %v85, 32
  %v361 = vpop.permute.xlu0 %360
  %362 = vrot.lane.b32.xlu0 %v86, 32
  %v363 = vpop.permute.xlu0 %362
  %364 = vrot.lane.b32.xlu0 %v87, 32
  %v365 = vpop.permute.xlu0 %364
  %366 = vrot.lane.b32.xlu0 %v88, 32
  %v367 = vpop.permute.xlu0 %366
  %368 = vrot.lane.b32.xlu0 %v89, 32
  %v369 = vpop.permute.xlu0 %368
  %370 = vrot.lane.b32.xlu0 %v90, 32
  %v371 = vpop.permute.xlu0 %370
  %v388 = vmul.f32 %v315, %v341
  %v389 = vmul.f32 %v317, %v343
  %v390 = vmul.f32 %v320, %v345
  %v391 = vmul.f32 %v322, %v347
  %v392 = vmul.f32 %v315, %v349
  %v393 = vmul.f32 %v317, %v351
  %v394 = vmul.f32 %v320, %v353
  %v395 = vmul.f32 %v322, %v355
  %v396 = vmul.f32 %v315, %v357
  %v397 = vmul.f32 %v317, %v359
  %v398 = vmul.f32 %v320, %v361
  %v399 = vmul.f32 %v322, %v363
  %v400 = vmul.f32 %v315, %v365
  %v401 = vmul.f32 %v317, %v367
  %v402 = vmul.f32 %v320, %v369
  %v403 = vmul.f32 %v322, %v371
  %404 = vrot.lane.b32.xlu0 %v75, 64
  %v405 = vpop.permute.xlu0 %404
  %406 = vrot.lane.b32.xlu0 %v76, 64
  %v407 = vpop.permute.xlu0 %406
  %408 = vrot.lane.b32.xlu0 %v77, 64
  %v409 = vpop.permute.xlu0 %408
  %410 = vrot.lane.b32.xlu0 %v78, 64
  %v411 = vpop.permute.xlu0 %410
  %412 = vrot.lane.b32.xlu0 %v79, 64
  %v413 = vpop.permute.xlu0 %412
  %414 = vrot.lane.b32.xlu0 %v80, 64
  %v415 = vpop.permute.xlu0 %414
  %416 = vrot.lane.b32.xlu0 %v81, 64
  %v417 = vpop.permute.xlu0 %416
  %418 = vrot.lane.b32.xlu0 %v82, 64
  %v419 = vpop.permute.xlu0 %418
  %420 = vrot.lane.b32.xlu0 %v83, 64
  %v421 = vpop.permute.xlu0 %420
  %422 = vrot.lane.b32.xlu0 %v84, 64
  %v423 = vpop.permute.xlu0 %422
  %424 = vrot.lane.b32.xlu0 %v85, 64
  %v425 = vpop.permute.xlu0 %424
  %426 = vrot.lane.b32.xlu0 %v86, 64
  %v427 = vpop.permute.xlu0 %426
  %428 = vrot.lane.b32.xlu0 %v87, 64
  %v429 = vpop.permute.xlu0 %428
  %430 = vrot.lane.b32.xlu0 %v88, 64
  %v431 = vpop.permute.xlu0 %430
  %432 = vrot.lane.b32.xlu0 %v89, 64
  %v433 = vpop.permute.xlu0 %432
  %434 = vrot.lane.b32.xlu0 %v90, 64
  %v435 = vpop.permute.xlu0 %434
  %v452 = vmul.f32 %v315, %v405
  %v453 = vmul.f32 %v317, %v407
  %v454 = vmul.f32 %v320, %v409
  %v455 = vmul.f32 %v322, %v411
  %v456 = vmul.f32 %v315, %v413
  %v457 = vmul.f32 %v317, %v415
  %v458 = vmul.f32 %v320, %v417
  %v459 = vmul.f32 %v322, %v419
  %v460 = vmul.f32 %v315, %v421
  %v461 = vmul.f32 %v317, %v423
  %v462 = vmul.f32 %v320, %v425
  %v463 = vmul.f32 %v322, %v427
  %v464 = vmul.f32 %v315, %v429
  %v465 = vmul.f32 %v317, %v431
  %v466 = vmul.f32 %v320, %v433
  %v467 = vmul.f32 %v322, %v435
  %v468 = vpack.c.bf16 %v317, %v315
  %v469 = vpack.c.bf16 %v322, %v320
  %v470 = vpack.c.bf16 %v389, %v388
  %v471 = vpack.c.bf16 %v391, %v390
  %v472 = vpack.c.bf16 %v393, %v392
  %v473 = vpack.c.bf16 %v395, %v394
  %v474 = vpack.c.bf16 %v397, %v396
  %v475 = vpack.c.bf16 %v399, %v398
  %v476 = vpack.c.bf16 %v401, %v400
  %v477 = vpack.c.bf16 %v403, %v402
  %486 = vrot.lane.b32.xlu0 %v470, 96
  %v487 = vpop.permute.xlu0 %486
  %488 = vrot.lane.b32.xlu0 %v471, 96
  %v489 = vpop.permute.xlu0 %488
  %490 = vrot.lane.b32.xlu0 %v472, 96
  %v491 = vpop.permute.xlu0 %490
  %492 = vrot.lane.b32.xlu0 %v473, 96
  %v493 = vpop.permute.xlu0 %492
  %494 = vrot.lane.b32.xlu0 %v474, 96
  %v495 = vpop.permute.xlu0 %494
  %496 = vrot.lane.b32.xlu0 %v475, 96
  %v497 = vpop.permute.xlu0 %496
  %498 = vrot.lane.b32.xlu0 %v476, 96
  %v499 = vpop.permute.xlu0 %498
  %500 = vrot.lane.b32.xlu0 %v477, 96
  %v501 = vpop.permute.xlu0 %500
  %v503 = vsel %vm298, %v468, 0
  %v506 = vsel %vm298, %v469, 0
  %v509 = vsel %vm298, %v487, 0
  %v512 = vsel %vm298, %v489, 0
  %v515 = vsel %vm298, %v491, 0
  %v518 = vsel %vm298, %v493, 0
  %v521 = vsel %vm298, %v495, 0
  %v524 = vsel %vm298, %v497, 0
  %v527 = vsel %vm298, %v499, 0
  %v530 = vsel %vm298, %v501, 0
  %532 = vmatpush.bf16.xpose.msra.mxu0 %v530
  %533 = vmatpush.bf16.xpose.msra.mxu0 %v527
  %534 = vmatpush.bf16.xpose.msra.mxu0 %v524
  %535 = vmatpush.bf16.xpose.msra.mxu0 %v521
  %536 = vmatpush.bf16.xpose.msra.mxu0 %v518
  %537 = vmatpush.bf16.xpose.msra.mxu0 %v515
  %538 = vmatpush.bf16.xpose.msra.mxu0 %v512
  %539 = vmatpush.bf16.xpose.msra.mxu0 %v509
  %540 = vmatmul.bf16.gmra.mxu0 %v503
  %v541 = vpop.f32.mrf.mxu0
  %v542 = vadd.f32 0.0, %v541
  %v543 = vpop.f32.mrf.mxu0
  %v544 = vadd.f32 0.0, %v543
  %545 = vmatmul.bf16.gmra.mxu0 %v506
  %v546 = vpop.f32.mrf.mxu0
  %v547 = vadd.f32 0.0, %v546
  %v548 = vpop.f32.mrf.mxu0
  %v549 = vadd.f32 0.0, %v548
  %550 = vdwg.mxu0
  %v551 = vmul.f32 %v542, 0.35355338
  %v552 = vmul.f32 %v544, 0.35355338
  %v553 = vmul.f32 %v547, 0.35355338
  %v554 = vmul.f32 %v549, 0.35355338
  %v555 = vadd.f32 %v551, %v91
  %v556 = vadd.f32 %v552, %v92
  %v557 = vadd.f32 %v553, %v93
  %v558 = vadd.f32 %v554, %v94
  %559 = vmax.xlane.f32.xlu0 %v555
  %v560 = vpop.xlane.xlu0 %559
  %561 = vmax.xlane.f32.xlu0 %v556
  %v562 = vpop.xlane.xlu0 %561
  %563 = vmax.xlane.f32.xlu0 %v557
  %v564 = vpop.xlane.xlu0 %563
  %565 = vmax.xlane.f32.xlu0 %v558
  %v566 = vpop.xlane.xlu0 %565
  %v567 = vsub.f32 %v555, %v560
  %v568 = vsub.f32 %v556, %v562
  %v569 = vsub.f32 %v557, %v564
  %v570 = vsub.f32 %v558, %v566
  %v571 = vmul.f32 %v567, 1.442695
  %v572 = vpow.pop %v571
  %v573 = vmul.f32 %v568, 1.442695
  %v574 = vpow.pop %v573
  %v575 = vmul.f32 %v569, 1.442695
  %v576 = vpow.pop %v575
  %v577 = vmul.f32 %v570, 1.442695
  %v578 = vpow.pop %v577
  %579 = vmatpush.msra.mxu0 %v110
  %580 = vmatpush.msra.mxu0 %v109
  %581 = vmatpush.msra.mxu0 %v108
  %582 = vmatpush.msra.mxu0 %v107
  %583 = vmatpush.msra.mxu0 %v106
  %584 = vmatpush.msra.mxu0 %v105
  %585 = vmatpush.msra.mxu0 %v104
  %586 = vmatpush.msra.mxu0 %v103
  %587 = vmatpush.msra.mxu0 %v102
  %588 = vmatpush.msra.mxu0 %v101
  %589 = vmatpush.msra.mxu0 %v100
  %590 = vmatpush.msra.mxu0 %v99
  %591 = vmatpush.msra.mxu0 %v98
  %592 = vmatpush.msra.mxu0 %v97
  %593 = vmatpush.msra.mxu0 %v96
  %594 = vmatpush.msra.mxu0 %v95
  %595 = vmatmul.f32.gmra.mxu0 %v572
  %v596 = vpop.f32.mrf.mxu0
  %v597 = vadd.f32 0.0, %v596
  %598 = vmatmul.f32.gmra.mxu0 %v574
  %v599 = vpop.f32.mrf.mxu0
  %v600 = vadd.f32 0.0, %v599
  %601 = vmatmul.f32.gmra.mxu0 %v576
  %v602 = vpop.f32.mrf.mxu0
  %v603 = vadd.f32 0.0, %v602
  %604 = vmatmul.f32.gmra.mxu0 %v578
  %v605 = vpop.f32.mrf.mxu0
  %v606 = vadd.f32 0.0, %v605
  %607 = vdwg.mxu0
  %v608 = vrcp.pop %v597
  %v609 = vrcp.pop %v600
  %v610 = vrcp.pop %v603
  %v611 = vrcp.pop %v606
  %v612 = vmul.f32 %v572, %v608
  %v613 = vmul.f32 %v574, %v609
  %v614 = vmul.f32 %v576, %v610
  %v615 = vmul.f32 %v578, %v611
  %v616 = vpack.c.bf16 %v613, %v612
  %v617 = vpack.c.bf16 %v615, %v614
  %v618 = vpack.c.bf16 %v453, %v452
  %v619 = vpack.c.bf16 %v455, %v454
  %v620 = vpack.c.bf16 %v457, %v456
  %v621 = vpack.c.bf16 %v459, %v458
  %v622 = vpack.c.bf16 %v461, %v460
  %v623 = vpack.c.bf16 %v463, %v462
  %v624 = vpack.c.bf16 %v465, %v464
  %v625 = vpack.c.bf16 %v467, %v466
  %634 = vrot.lane.b32.xlu0 %v618, 64
  %v635 = vpop.permute.xlu0 %634
  %636 = vrot.lane.b32.xlu0 %v619, 64
  %v637 = vpop.permute.xlu0 %636
  %638 = vrot.lane.b32.xlu0 %v620, 64
  %v639 = vpop.permute.xlu0 %638
  %640 = vrot.lane.b32.xlu0 %v621, 64
  %v641 = vpop.permute.xlu0 %640
  %642 = vrot.lane.b32.xlu0 %v622, 64
  %v643 = vpop.permute.xlu0 %642
  %644 = vrot.lane.b32.xlu0 %v623, 64
  %v645 = vpop.permute.xlu0 %644
  %646 = vrot.lane.b32.xlu0 %v624, 64
  %v647 = vpop.permute.xlu0 %646
  %648 = vrot.lane.b32.xlu0 %v625, 64
  %v649 = vpop.permute.xlu0 %648
  %658 = vmatpush.bf16.msra.mxu0 %v649
  %659 = vmatpush.bf16.msra.mxu0 %v647
  %660 = vmatpush.bf16.msra.mxu0 %v645
  %661 = vmatpush.bf16.msra.mxu0 %v643
  %662 = vmatpush.bf16.msra.mxu0 %v641
  %663 = vmatpush.bf16.msra.mxu0 %v639
  %664 = vmatpush.bf16.msra.mxu0 %v637
  %665 = vmatpush.bf16.msra.mxu0 %v635
  %666 = vmatmul.bf16.gmra.mxu0 %v616
  %v667 = vpop.f32.mrf.mxu0
  %v668 = vadd.f32 0.0, %v667
  %v669 = vpop.f32.mrf.mxu0
  %v670 = vadd.f32 0.0, %v669
  %671 = vmatmul.bf16.gmra.mxu0 %v617
  %v672 = vpop.f32.mrf.mxu0
  %v673 = vadd.f32 0.0, %v672
  %v674 = vpop.f32.mrf.mxu0
  %v675 = vadd.f32 0.0, %v674
  %676 = vdwg.mxu0
  %v677 = vpack.c.bf16 %v670, %v668
  %v678 = vpack.c.bf16 %v675, %v673
  %v679 = vld [vmem:[%s6] sm:$0xf]
  %v680 = vld [vmem:[%s6 + $0x4] sm:$0xf]
  %v681 = vld [vmem:[%s6 + $0x8] sm:$0xf]
  %v682 = vld [vmem:[%s6 + $0xc] sm:$0xf]
  %v683 = vld [vmem:[%s7] sm:$0x1]
  %v685 = vperm.slane %v683, 0
  %v691 = vunpack.c.l.b16 %v679
  %v692 = vunpack.c.l.b16 %v680
  %v693 = vunpack.c.l.b16 %v681
  %v694 = vunpack.c.l.b16 %v682
  %v695 = vpack.c.b16 %v692, %v691
  %v696 = vpack.c.b16 %v694, %v693
  %v700 = vsel %vm298, %v677, 0
  %v703 = vsel %vm298, %v678, 0
  %705 = vmatpush.bf16.msra.mxu0 0
  %706 = vmatpush.bf16.msra.mxu0 0
  %707 = vmatpush.bf16.msra.mxu0 0
  %708 = vmatpush.bf16.msra.mxu0 0
  %709 = vmatpush.bf16.msra.mxu0 0
  %710 = vmatpush.bf16.msra.mxu0 0
  %711 = vmatpush.bf16.msra.mxu0 %v696
  %712 = vmatpush.bf16.msra.mxu0 %v695
  %713 = vmatmul.bf16.gmra.mxu0 %v700
  %v714 = vpop.f32.mrf.mxu0
  %v715 = vadd.f32 %v685, %v714
  %v716 = vpop.f32.mrf.mxu0
  %v717 = vadd.f32 %v685, %v716
  %718 = vmatmul.bf16.gmra.mxu0 %v703
  %v719 = vpop.f32.mrf.mxu0
  %v720 = vadd.f32 %v685, %v719
  %v721 = vpop.f32.mrf.mxu0
  %v722 = vadd.f32 %v685, %v721
  %723 = vdwg.mxu0
  %v724 = vadd.f32 %v272, %v715
  %v725 = vadd.f32 %v273, %v717
  %v726 = vadd.f32 %v274, %v720
  %v727 = vadd.f32 %v275, %v722
  %v728 = vld [vmem:[%s8] sm:$0x1]
  %v729 = vld [vmem:[%s9] sm:$0x1]
  %v730 = vsel %vm298, %v724, 0.0
  %731 = vadd.xlane.f32.xlu0 %v730
  %v732 = vpop.xlane.xlu0 %731
  %v733 = vsel %vm298, %v725, 0.0
  %734 = vadd.xlane.f32.xlu0 %v733
  %v735 = vpop.xlane.xlu0 %734
  %v736 = vsel %vm298, %v726, 0.0
  %737 = vadd.xlane.f32.xlu0 %v736
  %v738 = vpop.xlane.xlu0 %737
  %v739 = vsel %vm298, %v727, 0.0
  %740 = vadd.xlane.f32.xlu0 %v739
  %v741 = vpop.xlane.xlu0 %740
  %v742 = vrcp.pop 32.0
  %v743 = vmul.f32 32.0, %v742
  %v744 = vsub.f32 1.0, %v743
  %v745 = vmul.f32 %v742, %v744
  %v746 = vadd.f32 %v742, %v745
  %vm747 = vweird.f32 %v742
  %v748 = vsel %vm747, %v742, %v746
  %v749 = vmul.f32 %v732, %v748
  %v750 = vmul.f32 %v735, %v748
  %v751 = vmul.f32 %v738, %v748
  %v752 = vmul.f32 %v741, %v748
  %v753 = vsub.f32 %v724, %v749
  %v754 = vsub.f32 %v725, %v750
  %v755 = vsub.f32 %v726, %v751
  %v756 = vsub.f32 %v727, %v752
  %v757 = vmul.f32 %v753, %v753
  %v758 = vmul.f32 %v754, %v754
  %v759 = vmul.f32 %v755, %v755
  %v760 = vmul.f32 %v756, %v756
  %v761 = vsel %vm298, %v757, 0.0
  %762 = vadd.xlane.f32.xlu0 %v761
  %v763 = vpop.xlane.xlu0 %762
  %v764 = vsel %vm298, %v758, 0.0
  %765 = vadd.xlane.f32.xlu0 %v764
  %v766 = vpop.xlane.xlu0 %765
  %v767 = vsel %vm298, %v759, 0.0
  %768 = vadd.xlane.f32.xlu0 %v767
  %v769 = vpop.xlane.xlu0 %768
  %v770 = vsel %vm298, %v760, 0.0
  %771 = vadd.xlane.f32.xlu0 %v770
  %v772 = vpop.xlane.xlu0 %771
  %v773 = vmul.f32 %v763, %v748
  %v774 = vmul.f32 %v766, %v748
  %v775 = vmul.f32 %v769, %v748
  %v776 = vmul.f32 %v772, %v748
  %v777 = vadd.f32 %v773, 1e-05
  %v778 = vadd.f32 %v774, 1e-05
  %v779 = vadd.f32 %v775, 1e-05
  %v780 = vadd.f32 %v776, 1e-05
  %v781 = vrsqrt.pop %v777
  %v782 = vmul.f32 %v781, %v777
  %v783 = vmul.f32 %v782, %v781
  %v784 = vmul.f32 0.5, %v783
  %v785 = vsub.f32 1.5, %v784
  %v786 = vmul.f32 %v781, %v785
  %vm787 = vweird.f32 %v777
  %vm788 = vweird.f32 %v781
  %vm789 = vmor %vm787, %vm788
  %v790 = vsel %vm789, %v781, %v786
  %v791 = vrsqrt.pop %v778
  %v792 = vmul.f32 %v791, %v778
  %v793 = vmul.f32 %v792, %v791
  %v794 = vmul.f32 0.5, %v793
  %v795 = vsub.f32 1.5, %v794
  %v796 = vmul.f32 %v791, %v795
  %vm797 = vweird.f32 %v778
  %vm798 = vweird.f32 %v791
  %vm799 = vmor %vm797, %vm798
  %v800 = vsel %vm799, %v791, %v796
  %v801 = vrsqrt.pop %v779
  %v802 = vmul.f32 %v801, %v779
  %v803 = vmul.f32 %v802, %v801
  %v804 = vmul.f32 0.5, %v803
  %v805 = vsub.f32 1.5, %v804
  %v806 = vmul.f32 %v801, %v805
  %vm807 = vweird.f32 %v779
  %vm808 = vweird.f32 %v801
  %vm809 = vmor %vm807, %vm808
  %v810 = vsel %vm809, %v801, %v806
  %v811 = vrsqrt.pop %v780
  %v812 = vmul.f32 %v811, %v780
  %v813 = vmul.f32 %v812, %v811
  %v814 = vmul.f32 0.5, %v813
  %v815 = vsub.f32 1.5, %v814
  %v816 = vmul.f32 %v811, %v815
  %vm817 = vweird.f32 %v780
  %vm818 = vweird.f32 %v811
  %vm819 = vmor %vm817, %vm818
  %v820 = vsel %vm819, %v811, %v816
  %v821 = vmul.f32 %v753, %v790
  %v822 = vmul.f32 %v754, %v800
  %v823 = vmul.f32 %v755, %v810
  %v824 = vmul.f32 %v756, %v820
  %v826 = vperm.slane %v728, 0
  %v828 = vmul.f32 %v821, %v826
  %v829 = vmul.f32 %v822, %v826
  %v830 = vmul.f32 %v823, %v826
  %v831 = vmul.f32 %v824, %v826
  %v833 = vperm.slane %v729, 0
  %v835 = vadd.f32 %v828, %v833
  %v836 = vadd.f32 %v829, %v833
  %v837 = vadd.f32 %v830, %v833
  %v838 = vadd.f32 %v831, %v833
  %v839 = vpack.c.bf16 %v836, %v835
  %v840 = vpack.c.bf16 %v838, %v837
  %v841 = vld [vmem:[%s10] sm:$0xf]
  %v842 = vld [vmem:[%s10 + $0x4] sm:$0xf]
  %v843 = vld [vmem:[%s10 + $0x8] sm:$0xf]
  %v844 = vld [vmem:[%s10 + $0xc] sm:$0xf]
  %v845 = vld [vmem:[%s11] sm:$0x1]
  %v847 = vperm.slane %v845, 0
  %v853 = vunpack.c.l.b16 %v841
  %v854 = vunpack.c.l.b16 %v842
  %v855 = vunpack.c.l.b16 %v843
  %v856 = vunpack.c.l.b16 %v844
  %v857 = vpack.c.b16 %v854, %v853
  %v858 = vpack.c.b16 %v856, %v855
  %v862 = vsel %vm298, %v839, 0
  %v865 = vsel %vm298, %v840, 0
  %867 = vmatpush.bf16.msra.mxu0 0
  %868 = vmatpush.bf16.msra.mxu0 0
  %869 = vmatpush.bf16.msra.mxu0 0
  %870 = vmatpush.bf16.msra.mxu0 0
  %871 = vmatpush.bf16.msra.mxu0 0
  %872 = vmatpush.bf16.msra.mxu0 0
  %873 = vmatpush.bf16.msra.mxu0 %v858
  %874 = vmatpush.bf16.msra.mxu0 %v857
  %875 = vmatmul.bf16.gmra.mxu0 %v862
  %v876 = vpop.f32.mrf.mxu0
  %v877 = vadd.f32 %v847, %v876
  %v878 = vpop.f32.mrf.mxu0
  %v879 = vadd.f32 %v847, %v878
  %880 = vmatmul.bf16.gmra.mxu0 %v865
  %v881 = vpop.f32.mrf.mxu0
  %v882 = vadd.f32 %v847, %v881
  %v883 = vpop.f32.mrf.mxu0
  %v884 = vadd.f32 %v847, %v883
  %885 = vdwg.mxu0
  %v886 = vmul.f32 %v877, %v877
  %v887 = vmul.f32 %v879, %v879
  %v888 = vmul.f32 %v882, %v882
  %v889 = vmul.f32 %v884, %v884
  %v890 = vmul.f32 %v877, %v886
  %v891 = vmul.f32 %v879, %v887
  %v892 = vmul.f32 %v882, %v888
  %v893 = vmul.f32 %v884, %v889
  %v894 = vmul.f32 %v890, 0.044715
  %v895 = vmul.f32 %v891, 0.044715
  %v896 = vmul.f32 %v892, 0.044715
  %v897 = vmul.f32 %v893, 0.044715
  %v898 = vadd.f32 %v877, %v894
  %v899 = vadd.f32 %v879, %v895
  %v900 = vadd.f32 %v882, %v896
  %v901 = vadd.f32 %v884, %v897
  %v902 = vmul.f32 %v898, 0.7978846
  %v903 = vmul.f32 %v899, 0.7978846
  %v904 = vmul.f32 %v900, 0.7978846
  %v905 = vmul.f32 %v901, 0.7978846
  %v906 = vtanh.pop %v902
  %v907 = vtanh.pop %v903
  %v908 = vtanh.pop %v904
  %v909 = vtanh.pop %v905
  %v910 = vadd.f32 %v906, 1.0
  %v911 = vadd.f32 %v907, 1.0
  %v912 = vadd.f32 %v908, 1.0
  %v913 = vadd.f32 %v909, 1.0
  %v914 = vmul.f32 %v910, 0.5
  %v915 = vmul.f32 %v911, 0.5
  %v916 = vmul.f32 %v912, 0.5
  %v917 = vmul.f32 %v913, 0.5
  %v918 = vmul.f32 %v877, %v914
  %v919 = vmul.f32 %v879, %v915
  %v920 = vmul.f32 %v882, %v916
  %v921 = vmul.f32 %v884, %v917
  %v922 = vpack.c.bf16 %v919, %v918
  %v923 = vpack.c.bf16 %v921, %v920
  %v924 = vld [vmem:[%s12] sm:$0xf]
  %v925 = vld [vmem:[%s12 + $0x4] sm:$0xf]
  %v926 = vld [vmem:[%s12 + $0x8] sm:$0xf]
  %v927 = vld [vmem:[%s12 + $0xc] sm:$0xf]
  %v928 = vld [vmem:[%s12 + $0x10] sm:$0xf]
  %v929 = vld [vmem:[%s12 + $0x14] sm:$0xf]
  %v930 = vld [vmem:[%s12 + $0x18] sm:$0xf]
  %v931 = vld [vmem:[%s12 + $0x1c] sm:$0xf]
  %v932 = vld [vmem:[%s12 + $0x20] sm:$0xf]
  %v933 = vld [vmem:[%s12 + $0x24] sm:$0xf]
  %v934 = vld [vmem:[%s12 + $0x28] sm:$0xf]
  %v935 = vld [vmem:[%s12 + $0x2c] sm:$0xf]
  %v936 = vld [vmem:[%s12 + $0x30] sm:$0xf]
  %v937 = vld [vmem:[%s12 + $0x34] sm:$0xf]
  %v938 = vld [vmem:[%s12 + $0x38] sm:$0xf]
  %v939 = vld [vmem:[%s12 + $0x3c] sm:$0xf]
  %v940 = vld [vmem:[%s13] sm:$0x1]
  %v942 = vperm.slane %v940, 0
  %v960 = vunpack.c.l.b16 %v924
  %v961 = vunpack.c.l.b16 %v925
  %v962 = vunpack.c.l.b16 %v926
  %v963 = vunpack.c.l.b16 %v927
  %v964 = vunpack.c.l.b16 %v928
  %v965 = vunpack.c.l.b16 %v929
  %v966 = vunpack.c.l.b16 %v930
  %v967 = vunpack.c.l.b16 %v931
  %v968 = vunpack.c.l.b16 %v932
  %v969 = vunpack.c.l.b16 %v933
  %v970 = vunpack.c.l.b16 %v934
  %v971 = vunpack.c.l.b16 %v935
  %v972 = vunpack.c.l.b16 %v936
  %v973 = vunpack.c.l.b16 %v937
  %v974 = vunpack.c.l.b16 %v938
  %v975 = vunpack.c.l.b16 %v939
  %v976 = vpack.c.b16 %v961, %v960
  %v977 = vpack.c.b16 %v963, %v962
  %v978 = vpack.c.b16 %v965, %v964
  %v979 = vpack.c.b16 %v967, %v966
  %v980 = vpack.c.b16 %v969, %v968
  %v981 = vpack.c.b16 %v971, %v970
  %v982 = vpack.c.b16 %v973, %v972
  %v983 = vpack.c.b16 %v975, %v974
  %992 = vmatpush.bf16.msra.mxu0 %v983
  %993 = vmatpush.bf16.msra.mxu0 %v982
  %994 = vmatpush.bf16.msra.mxu0 %v981
  %995 = vmatpush.bf16.msra.mxu0 %v980
  %996 = vmatpush.bf16.msra.mxu0 %v979
  %997 = vmatpush.bf16.msra.mxu0 %v978
  %998 = vmatpush.bf16.msra.mxu0 %v977
  %999 = vmatpush.bf16.msra.mxu0 %v976
  %1000 = vmatmul.bf16.gmra.mxu0 %v922
  %v1001 = vpop.f32.mrf.mxu0
  %v1002 = vadd.f32 %v942, %v1001
  %v1003 = vpop.f32.mrf.mxu0
  %v1004 = vadd.f32 %v942, %v1003
  %1005 = vmatmul.bf16.gmra.mxu0 %v923
  %v1006 = vpop.f32.mrf.mxu0
  %v1007 = vadd.f32 %v942, %v1006
  %v1008 = vpop.f32.mrf.mxu0
  %v1009 = vadd.f32 %v942, %v1008
  %1010 = vdwg.mxu0
  %v1011 = vadd.f32 %v835, %v1002
  %v1012 = vadd.f32 %v836, %v1004
  %v1013 = vadd.f32 %v837, %v1007
  %v1014 = vadd.f32 %v838, %v1009
  %v1015 = vld [vmem:[%s14] sm:$0x1]
  %v1016 = vld [vmem:[%s15] sm:$0x1]
  %v1017 = vsel %vm298, %v1011, 0.0
  %1018 = vadd.xlane.f32.xlu0 %v1017
  %v1019 = vpop.xlane.xlu0 %1018
  %v1020 = vsel %vm298, %v1012, 0.0
  %1021 = vadd.xlane.f32.xlu0 %v1020
  %v1022 = vpop.xlane.xlu0 %1021
  %v1023 = vsel %vm298, %v1013, 0.0
  %1024 = vadd.xlane.f32.xlu0 %v1023
  %v1025 = vpop.xlane.xlu0 %1024
  %v1026 = vsel %vm298, %v1014, 0.0
  %1027 = vadd.xlane.f32.xlu0 %v1026
  %v1028 = vpop.xlane.xlu0 %1027
  %v1029 = vmul.f32 %v1019, %v748
  %v1030 = vmul.f32 %v1022, %v748
  %v1031 = vmul.f32 %v1025, %v748
  %v1032 = vmul.f32 %v1028, %v748
  %v1033 = vsub.f32 %v1011, %v1029
  %v1034 = vsub.f32 %v1012, %v1030
  %v1035 = vsub.f32 %v1013, %v1031
  %v1036 = vsub.f32 %v1014, %v1032
  %v1037 = vmul.f32 %v1033, %v1033
  %v1038 = vmul.f32 %v1034, %v1034
  %v1039 = vmul.f32 %v1035, %v1035
  %v1040 = vmul.f32 %v1036, %v1036
  %v1041 = vsel %vm298, %v1037, 0.0
  %1042 = vadd.xlane.f32.xlu0 %v1041
  %v1043 = vpop.xlane.xlu0 %1042
  %v1044 = vsel %vm298, %v1038, 0.0
  %1045 = vadd.xlane.f32.xlu0 %v1044
  %v1046 = vpop.xlane.xlu0 %1045
  %v1047 = vsel %vm298, %v1039, 0.0
  %1048 = vadd.xlane.f32.xlu0 %v1047
  %v1049 = vpop.xlane.xlu0 %1048
  %v1050 = vsel %vm298, %v1040, 0.0
  %1051 = vadd.xlane.f32.xlu0 %v1050
  %v1052 = vpop.xlane.xlu0 %1051
  %v1053 = vmul.f32 %v1043, %v748
  %v1054 = vmul.f32 %v1046, %v748
  %v1055 = vmul.f32 %v1049, %v748
  %v1056 = vmul.f32 %v1052, %v748
  %v1057 = vadd.f32 %v1053, 1e-05
  %v1058 = vadd.f32 %v1054, 1e-05
  %v1059 = vadd.f32 %v1055, 1e-05
  %v1060 = vadd.f32 %v1056, 1e-05
  %v1061 = vrsqrt.pop %v1057
  %v1062 = vmul.f32 %v1061, %v1057
  %v1063 = vmul.f32 %v1062, %v1061
  %v1064 = vmul.f32 0.5, %v1063
  %v1065 = vsub.f32 1.5, %v1064
  %v1066 = vmul.f32 %v1061, %v1065
  %vm1067 = vweird.f32 %v1057
  %vm1068 = vweird.f32 %v1061
  %vm1069 = vmor %vm1067, %vm1068
  %v1070 = vsel %vm1069, %v1061, %v1066
  %v1071 = vrsqrt.pop %v1058
  %v1072 = vmul.f32 %v1071, %v1058
  %v1073 = vmul.f32 %v1072, %v1071
  %v1074 = vmul.f32 0.5, %v1073
  %v1075 = vsub.f32 1.5, %v1074
  %v1076 = vmul.f32 %v1071, %v1075
  %vm1077 = vweird.f32 %v1058
  %vm1078 = vweird.f32 %v1071
  %vm1079 = vmor %vm1077, %vm1078
  %v1080 = vsel %vm1079, %v1071, %v1076
  %v1081 = vrsqrt.pop %v1059
  %v1082 = vmul.f32 %v1081, %v1059
  %v1083 = vmul.f32 %v1082, %v1081
  %v1084 = vmul.f32 0.5, %v1083
  %v1085 = vsub.f32 1.5, %v1084
  %v1086 = vmul.f32 %v1081, %v1085
  %vm1087 = vweird.f32 %v1059
  %vm1088 = vweird.f32 %v1081
  %vm1089 = vmor %vm1087, %vm1088
  %v1090 = vsel %vm1089, %v1081, %v1086
  %v1091 = vrsqrt.pop %v1060
  %v1092 = vmul.f32 %v1091, %v1060
  %v1093 = vmul.f32 %v1092, %v1091
  %v1094 = vmul.f32 0.5, %v1093
  %v1095 = vsub.f32 1.5, %v1094
  %v1096 = vmul.f32 %v1091, %v1095
  %vm1097 = vweird.f32 %v1060
  %vm1098 = vweird.f32 %v1091
  %vm1099 = vmor %vm1097, %vm1098
  %v1100 = vsel %vm1099, %v1091, %v1096
  %v1101 = vmul.f32 %v1033, %v1070
  %v1102 = vmul.f32 %v1034, %v1080
  %v1103 = vmul.f32 %v1035, %v1090
  %v1104 = vmul.f32 %v1036, %v1100
  %v1106 = vperm.slane %v1015, 0
  %v1108 = vmul.f32 %v1101, %v1106
  %v1109 = vmul.f32 %v1102, %v1106
  %v1110 = vmul.f32 %v1103, %v1106
  %v1111 = vmul.f32 %v1104, %v1106
  %v1113 = vperm.slane %v1016, 0
  %v1115 = vadd.f32 %v1108, %v1113
  %v1116 = vadd.f32 %v1109, %v1113
  %v1117 = vadd.f32 %v1110, %v1113
  %v1118 = vadd.f32 %v1111, %v1113
  %v1119 = vpack.c.bf16 %v1116, %v1115
  %v1120 = vpack.c.bf16 %v1118, %v1117
  %s1121 = scalar_lea.vmem %s4, 16
  %v1122 = vld [vmem:[%s1121] sm:$0xf]
  %v1123 = vld [vmem:[%s1121 + $0x4] sm:$0xf]
  %v1124 = vld [vmem:[%s1121 + $0x8] sm:$0xf]
  %v1125 = vld [vmem:[%s1121 + $0xc] sm:$0xf]
  %s1126 = scalar_lea.vmem %s5, 1
  %v1127 = vld [vmem:[%s1126] sm:$0x1]
  %v1129 = vperm.slane %v1127, 0
  %v1135 = vunpack.c.l.b16 %v1122
  %v1136 = vunpack.c.l.b16 %v1123
  %v1137 = vunpack.c.l.b16 %v1124
  %v1138 = vunpack.c.l.b16 %v1125
  %v1139 = vpack.c.b16 %v1136, %v1135
  %v1140 = vpack.c.b16 %v1138, %v1137
  %v1144 = vsel %vm298, %v1119, 0
  %v1147 = vsel %vm298, %v1120, 0
  %1149 = vmatpush.bf16.msra.mxu0 0
  %1150 = vmatpush.bf16.msra.mxu0 0
  %1151 = vmatpush.bf16.msra.mxu0 0
  %1152 = vmatpush.bf16.msra.mxu0 0
  %1153 = vmatpush.bf16.msra.mxu0 0
  %1154 = vmatpush.bf16.msra.mxu0 0
  %1155 = vmatpush.bf16.msra.mxu0 %v1140
  %1156 = vmatpush.bf16.msra.mxu0 %v1139
  %1157 = vmatmul.bf16.gmra.mxu0 %v1144
  %v1158 = vpop.f32.mrf.mxu0
  %v1159 = vadd.f32 %v1129, %v1158
  %v1160 = vpop.f32.mrf.mxu0
  %v1161 = vadd.f32 %v1129, %v1160
  %1162 = vmatmul.bf16.gmra.mxu0 %v1147
  %v1163 = vpop.f32.mrf.mxu0
  %v1164 = vadd.f32 %v1129, %v1163
  %v1165 = vpop.f32.mrf.mxu0
  %v1166 = vadd.f32 %v1129, %v1165
  %1167 = vdwg.mxu0
  %v1168 = vmul.f32 %v1159, %v341
  %v1169 = vmul.f32 %v1161, %v343
  %v1170 = vmul.f32 %v1164, %v345
  %v1171 = vmul.f32 %v1166, %v347
  %v1172 = vmul.f32 %v1159, %v349
  %v1173 = vmul.f32 %v1161, %v351
  %v1174 = vmul.f32 %v1164, %v353
  %v1175 = vmul.f32 %v1166, %v355
  %v1176 = vmul.f32 %v1159, %v357
  %v1177 = vmul.f32 %v1161, %v359
  %v1178 = vmul.f32 %v1164, %v361
  %v1179 = vmul.f32 %v1166, %v363
  %v1180 = vmul.f32 %v1159, %v365
  %v1181 = vmul.f32 %v1161, %v367
  %v1182 = vmul.f32 %v1164, %v369
  %v1183 = vmul.f32 %v1166, %v371
  %v1184 = vmul.f32 %v1159, %v405
  %v1185 = vmul.f32 %v1161, %v407
  %v1186 = vmul.f32 %v1164, %v409
  %v1187 = vmul.f32 %v1166, %v411
  %v1188 = vmul.f32 %v1159, %v413
  %v1189 = vmul.f32 %v1161, %v415
  %v1190 = vmul.f32 %v1164, %v417
  %v1191 = vmul.f32 %v1166, %v419
  %v1192 = vmul.f32 %v1159, %v421
  %v1193 = vmul.f32 %v1161, %v423
  %v1194 = vmul.f32 %v1164, %v425
  %v1195 = vmul.f32 %v1166, %v427
  %v1196 = vmul.f32 %v1159, %v429
  %v1197 = vmul.f32 %v1161, %v431
  %v1198 = vmul.f32 %v1164, %v433
  %v1199 = vmul.f32 %v1166, %v435
  %v1200 = vpack.c.bf16 %v1161, %v1159
  %v1201 = vpack.c.bf16 %v1166, %v1164
  %v1202 = vpack.c.bf16 %v1169, %v1168
  %v1203 = vpack.c.bf16 %v1171, %v1170
  %v1204 = vpack.c.bf16 %v1173, %v1172
  %v1205 = vpack.c.bf16 %v1175, %v1174
  %v1206 = vpack.c.bf16 %v1177, %v1176
  %v1207 = vpack.c.bf16 %v1179, %v1178
  %v1208 = vpack.c.bf16 %v1181, %v1180
  %v1209 = vpack.c.bf16 %v1183, %v1182
  %1218 = vrot.lane.b32.xlu0 %v1202, 96
  %v1219 = vpop.permute.xlu0 %1218
  %1220 = vrot.lane.b32.xlu0 %v1203, 96
  %v1221 = vpop.permute.xlu0 %1220
  %1222 = vrot.lane.b32.xlu0 %v1204, 96
  %v1223 = vpop.permute.xlu0 %1222
  %1224 = vrot.lane.b32.xlu0 %v1205, 96
  %v1225 = vpop.permute.xlu0 %1224
  %1226 = vrot.lane.b32.xlu0 %v1206, 96
  %v1227 = vpop.permute.xlu0 %1226
  %1228 = vrot.lane.b32.xlu0 %v1207, 96
  %v1229 = vpop.permute.xlu0 %1228
  %1230 = vrot.lane.b32.xlu0 %v1208, 96
  %v1231 = vpop.permute.xlu0 %1230
  %1232 = vrot.lane.b32.xlu0 %v1209, 96
  %v1233 = vpop.permute.xlu0 %1232
  %v1235 = vsel %vm298, %v1200, 0
  %v1238 = vsel %vm298, %v1201, 0
  %v1241 = vsel %vm298, %v1219, 0
  %v1244 = vsel %vm298, %v1221, 0
  %v1247 = vsel %vm298, %v1223, 0
  %v1250 = vsel %vm298, %v1225, 0
  %v1253 = vsel %vm298, %v1227, 0
  %v1256 = vsel %vm298, %v1229, 0
  %v1259 = vsel %vm298, %v1231, 0
  %v1262 = vsel %vm298, %v1233, 0
  %1264 = vmatpush.bf16.xpose.msra.mxu0 %v1262
  %1265 = vmatpush.bf16.xpose.msra.mxu0 %v1259
  %1266 = vmatpush.bf16.xpose.msra.mxu0 %v1256
  %1267 = vmatpush.bf16.xpose.msra.mxu0 %v1253
  %1268 = vmatpush.bf16.xpose.msra.mxu0 %v1250
  %1269 = vmatpush.bf16.xpose.msra.mxu0 %v1247
  %1270 = vmatpush.bf16.xpose.msra.mxu0 %v1244
  %1271 = vmatpush.bf16.xpose.msra.mxu0 %v1241
  %1272 = vmatmul.bf16.gmra.mxu0 %v1235
  %v1273 = vpop.f32.mrf.mxu0
  %v1274 = vadd.f32 0.0, %v1273
  %v1275 = vpop.f32.mrf.mxu0
  %v1276 = vadd.f32 0.0, %v1275
  %1277 = vmatmul.bf16.gmra.mxu0 %v1238
  %v1278 = vpop.f32.mrf.mxu0
  %v1279 = vadd.f32 0.0, %v1278
  %v1280 = vpop.f32.mrf.mxu0
  %v1281 = vadd.f32 0.0, %v1280
  %1282 = vdwg.mxu0
  %v1283 = vmul.f32 %v1274, 0.35355338
  %v1284 = vmul.f32 %v1276, 0.35355338
  %v1285 = vmul.f32 %v1279, 0.35355338
  %v1286 = vmul.f32 %v1281, 0.35355338
  %v1287 = vadd.f32 %v1283, %v91
  %v1288 = vadd.f32 %v1284, %v92
  %v1289 = vadd.f32 %v1285, %v93
  %v1290 = vadd.f32 %v1286, %v94
  %1291 = vmax.xlane.f32.xlu0 %v1287
  %v1292 = vpop.xlane.xlu0 %1291
  %1293 = vmax.xlane.f32.xlu0 %v1288
  %v1294 = vpop.xlane.xlu0 %1293
  %1295 = vmax.xlane.f32.xlu0 %v1289
  %v1296 = vpop.xlane.xlu0 %1295
  %1297 = vmax.xlane.f32.xlu0 %v1290
  %v1298 = vpop.xlane.xlu0 %1297
  %v1299 = vsub.f32 %v1287, %v1292
  %v1300 = vsub.f32 %v1288, %v1294
  %v1301 = vsub.f32 %v1289, %v1296
  %v1302 = vsub.f32 %v1290, %v1298
  %v1303 = vmul.f32 %v1299, 1.442695
  %v1304 = vpow.pop %v1303
  %v1305 = vmul.f32 %v1300, 1.442695
  %v1306 = vpow.pop %v1305
  %v1307 = vmul.f32 %v1301, 1.442695
  %v1308 = vpow.pop %v1307
  %v1309 = vmul.f32 %v1302, 1.442695
  %v1310 = vpow.pop %v1309
  %1311 = vmatpush.msra.mxu0 %v110
  %1312 = vmatpush.msra.mxu0 %v109
  %1313 = vmatpush.msra.mxu0 %v108
  %1314 = vmatpush.msra.mxu0 %v107
  %1315 = vmatpush.msra.mxu0 %v106
  %1316 = vmatpush.msra.mxu0 %v105
  %1317 = vmatpush.msra.mxu0 %v104
  %1318 = vmatpush.msra.mxu0 %v103
  %1319 = vmatpush.msra.mxu0 %v102
  %1320 = vmatpush.msra.mxu0 %v101
  %1321 = vmatpush.msra.mxu0 %v100
  %1322 = vmatpush.msra.mxu0 %v99
  %1323 = vmatpush.msra.mxu0 %v98
  %1324 = vmatpush.msra.mxu0 %v97
  %1325 = vmatpush.msra.mxu0 %v96
  %1326 = vmatpush.msra.mxu0 %v95
  %1327 = vmatmul.f32.gmra.mxu0 %v1304
  %v1328 = vpop.f32.mrf.mxu0
  %v1329 = vadd.f32 0.0, %v1328
  %1330 = vmatmul.f32.gmra.mxu0 %v1306
  %v1331 = vpop.f32.mrf.mxu0
  %v1332 = vadd.f32 0.0, %v1331
  %1333 = vmatmul.f32.gmra.mxu0 %v1308
  %v1334 = vpop.f32.mrf.mxu0
  %v1335 = vadd.f32 0.0, %v1334
  %1336 = vmatmul.f32.gmra.mxu0 %v1310
  %v1337 = vpop.f32.mrf.mxu0
  %v1338 = vadd.f32 0.0, %v1337
  %1339 = vdwg.mxu0
  %v1340 = vrcp.pop %v1329
  %v1341 = vrcp.pop %v1332
  %v1342 = vrcp.pop %v1335
  %v1343 = vrcp.pop %v1338
  %v1344 = vmul.f32 %v1304, %v1340
  %v1345 = vmul.f32 %v1306, %v1341
  %v1346 = vmul.f32 %v1308, %v1342
  %v1347 = vmul.f32 %v1310, %v1343
  %v1348 = vpack.c.bf16 %v1345, %v1344
  %v1349 = vpack.c.bf16 %v1347, %v1346
  %v1350 = vpack.c.bf16 %v1185, %v1184
  %v1351 = vpack.c.bf16 %v1187, %v1186
  %v1352 = vpack.c.bf16 %v1189, %v1188
  %v1353 = vpack.c.bf16 %v1191, %v1190
  %v1354 = vpack.c.bf16 %v1193, %v1192
  %v1355 = vpack.c.bf16 %v1195, %v1194
  %v1356 = vpack.c.bf16 %v1197, %v1196
  %v1357 = vpack.c.bf16 %v1199, %v1198
  %1366 = vrot.lane.b32.xlu0 %v1350, 64
  %v1367 = vpop.permute.xlu0 %1366
  %1368 = vrot.lane.b32.xlu0 %v1351, 64
  %v1369 = vpop.permute.xlu0 %1368
  %1370 = vrot.lane.b32.xlu0 %v1352, 64
  %v1371 = vpop.permute.xlu0 %1370
  %1372 = vrot.lane.b32.xlu0 %v1353, 64
  %v1373 = vpop.permute.xlu0 %1372
  %1374 = vrot.lane.b32.xlu0 %v1354, 64
  %v1375 = vpop.permute.xlu0 %1374
  %1376 = vrot.lane.b32.xlu0 %v1355, 64
  %v1377 = vpop.permute.xlu0 %1376
  %1378 = vrot.lane.b32.xlu0 %v1356, 64
  %v1379 = vpop.permute.xlu0 %1378
  %1380 = vrot.lane.b32.xlu0 %v1357, 64
  %v1381 = vpop.permute.xlu0 %1380
  %1390 = vmatpush.bf16.msra.mxu0 %v1381
  %1391 = vmatpush.bf16.msra.mxu0 %v1379
  %1392 = vmatpush.bf16.msra.mxu0 %v1377
  %1393 = vmatpush.bf16.msra.mxu0 %v1375
  %1394 = vmatpush.bf16.msra.mxu0 %v1373
  %1395 = vmatpush.bf16.msra.mxu0 %v1371
  %1396 = vmatpush.bf16.msra.mxu0 %v1369
  %1397 = vmatpush.bf16.msra.mxu0 %v1367
  %1398 = vmatmul.bf16.gmra.mxu0 %v1348
  %v1399 = vpop.f32.mrf.mxu0
  %v1400 = vadd.f32 0.0, %v1399
  %v1401 = vpop.f32.mrf.mxu0
  %v1402 = vadd.f32 0.0, %v1401
  %1403 = vmatmul.bf16.gmra.mxu0 %v1349
  %v1404 = vpop.f32.mrf.mxu0
  %v1405 = vadd.f32 0.0, %v1404
  %v1406 = vpop.f32.mrf.mxu0
  %v1407 = vadd.f32 0.0, %v1406
  %1408 = vdwg.mxu0
  %v1409 = vpack.c.bf16 %v1402, %v1400
  %v1410 = vpack.c.bf16 %v1407, %v1405
  %s1411 = scalar_lea.vmem %s6, 16
  %v1412 = vld [vmem:[%s1411] sm:$0xf]
  %v1413 = vld [vmem:[%s1411 + $0x4] sm:$0xf]
  %v1414 = vld [vmem:[%s1411 + $0x8] sm:$0xf]
  %v1415 = vld [vmem:[%s1411 + $0xc] sm:$0xf]
  %s1416 = scalar_lea.vmem %s7, 1
  %v1417 = vld [vmem:[%s1416] sm:$0x1]
  %v1419 = vperm.slane %v1417, 0
  %v1425 = vunpack.c.l.b16 %v1412
  %v1426 = vunpack.c.l.b16 %v1413
  %v1427 = vunpack.c.l.b16 %v1414
  %v1428 = vunpack.c.l.b16 %v1415
  %v1429 = vpack.c.b16 %v1426, %v1425
  %v1430 = vpack.c.b16 %v1428, %v1427
  %v1434 = vsel %vm298, %v1409, 0
  %v1437 = vsel %vm298, %v1410, 0
  %1439 = vmatpush.bf16.msra.mxu0 0
  %1440 = vmatpush.bf16.msra.mxu0 0
  %1441 = vmatpush.bf16.msra.mxu0 0
  %1442 = vmatpush.bf16.msra.mxu0 0
  %1443 = vmatpush.bf16.msra.mxu0 0
  %1444 = vmatpush.bf16.msra.mxu0 0
  %1445 = vmatpush.bf16.msra.mxu0 %v1430
  %1446 = vmatpush.bf16.msra.mxu0 %v1429
  %1447 = vmatmul.bf16.gmra.mxu0 %v1434
  %v1448 = vpop.f32.mrf.mxu0
  %v1449 = vadd.f32 %v1419, %v1448
  %v1450 = vpop.f32.mrf.mxu0
  %v1451 = vadd.f32 %v1419, %v1450
  %1452 = vmatmul.bf16.gmra.mxu0 %v1437
  %v1453 = vpop.f32.mrf.mxu0
  %v1454 = vadd.f32 %v1419, %v1453
  %v1455 = vpop.f32.mrf.mxu0
  %v1456 = vadd.f32 %v1419, %v1455
  %1457 = vdwg.mxu0
  %v1458 = vadd.f32 %v1115, %v1449
  %v1459 = vadd.f32 %v1116, %v1451
  %v1460 = vadd.f32 %v1117, %v1454
  %v1461 = vadd.f32 %v1118, %v1456
  %s1462 = scalar_lea.vmem %s8, 1
  %v1463 = vld [vmem:[%s1462] sm:$0x1]
  %s1464 = scalar_lea.vmem %s9, 1
  %v1465 = vld [vmem:[%s1464] sm:$0x1]
  %v1466 = vsel %vm298, %v1458, 0.0
  %1467 = vadd.xlane.f32.xlu0 %v1466
  %v1468 = vpop.xlane.xlu0 %1467
  %v1469 = vsel %vm298, %v1459, 0.0
  %1470 = vadd.xlane.f32.xlu0 %v1469
  %v1471 = vpop.xlane.xlu0 %1470
  %v1472 = vsel %vm298, %v1460, 0.0
  %1473 = vadd.xlane.f32.xlu0 %v1472
  %v1474 = vpop.xlane.xlu0 %1473
  %v1475 = vsel %vm298, %v1461, 0.0
  %1476 = vadd.xlane.f32.xlu0 %v1475
  %v1477 = vpop.xlane.xlu0 %1476
  %v1478 = vmul.f32 %v1468, %v748
  %v1479 = vmul.f32 %v1471, %v748
  %v1480 = vmul.f32 %v1474, %v748
  %v1481 = vmul.f32 %v1477, %v748
  %v1482 = vsub.f32 %v1458, %v1478
  %v1483 = vsub.f32 %v1459, %v1479
  %v1484 = vsub.f32 %v1460, %v1480
  %v1485 = vsub.f32 %v1461, %v1481
  %v1486 = vmul.f32 %v1482, %v1482
  %v1487 = vmul.f32 %v1483, %v1483
  %v1488 = vmul.f32 %v1484, %v1484
  %v1489 = vmul.f32 %v1485, %v1485
  %v1490 = vsel %vm298, %v1486, 0.0
  %1491 = vadd.xlane.f32.xlu0 %v1490
  %v1492 = vpop.xlane.xlu0 %1491
  %v1493 = vsel %vm298, %v1487, 0.0
  %1494 = vadd.xlane.f32.xlu0 %v1493
  %v1495 = vpop.xlane.xlu0 %1494
  %v1496 = vsel %vm298, %v1488, 0.0
  %1497 = vadd.xlane.f32.xlu0 %v1496
  %v1498 = vpop.xlane.xlu0 %1497
  %v1499 = vsel %vm298, %v1489, 0.0
  %1500 = vadd.xlane.f32.xlu0 %v1499
  %v1501 = vpop.xlane.xlu0 %1500
  %v1502 = vmul.f32 %v1492, %v748
  %v1503 = vmul.f32 %v1495, %v748
  %v1504 = vmul.f32 %v1498, %v748
  %v1505 = vmul.f32 %v1501, %v748
  %v1506 = vadd.f32 %v1502, 1e-05
  %v1507 = vadd.f32 %v1503, 1e-05
  %v1508 = vadd.f32 %v1504, 1e-05
  %v1509 = vadd.f32 %v1505, 1e-05
  %v1510 = vrsqrt.pop %v1506
  %v1511 = vmul.f32 %v1510, %v1506
  %v1512 = vmul.f32 %v1511, %v1510
  %v1513 = vmul.f32 0.5, %v1512
  %v1514 = vsub.f32 1.5, %v1513
  %v1515 = vmul.f32 %v1510, %v1514
  %vm1516 = vweird.f32 %v1506
  %vm1517 = vweird.f32 %v1510
  %vm1518 = vmor %vm1516, %vm1517
  %v1519 = vsel %vm1518, %v1510, %v1515
  %v1520 = vrsqrt.pop %v1507
  %v1521 = vmul.f32 %v1520, %v1507
  %v1522 = vmul.f32 %v1521, %v1520
  %v1523 = vmul.f32 0.5, %v1522
  %v1524 = vsub.f32 1.5, %v1523
  %v1525 = vmul.f32 %v1520, %v1524
  %vm1526 = vweird.f32 %v1507
  %vm1527 = vweird.f32 %v1520
  %vm1528 = vmor %vm1526, %vm1527
  %v1529 = vsel %vm1528, %v1520, %v1525
  %v1530 = vrsqrt.pop %v1508
  %v1531 = vmul.f32 %v1530, %v1508
  %v1532 = vmul.f32 %v1531, %v1530
  %v1533 = vmul.f32 0.5, %v1532
  %v1534 = vsub.f32 1.5, %v1533
  %v1535 = vmul.f32 %v1530, %v1534
  %vm1536 = vweird.f32 %v1508
  %vm1537 = vweird.f32 %v1530
  %vm1538 = vmor %vm1536, %vm1537
  %v1539 = vsel %vm1538, %v1530, %v1535
  %v1540 = vrsqrt.pop %v1509
  %v1541 = vmul.f32 %v1540, %v1509
  %v1542 = vmul.f32 %v1541, %v1540
  %v1543 = vmul.f32 0.5, %v1542
  %v1544 = vsub.f32 1.5, %v1543
  %v1545 = vmul.f32 %v1540, %v1544
  %vm1546 = vweird.f32 %v1509
  %vm1547 = vweird.f32 %v1540
  %vm1548 = vmor %vm1546, %vm1547
  %v1549 = vsel %vm1548, %v1540, %v1545
  %v1550 = vmul.f32 %v1482, %v1519
  %v1551 = vmul.f32 %v1483, %v1529
  %v1552 = vmul.f32 %v1484, %v1539
  %v1553 = vmul.f32 %v1485, %v1549
  %v1555 = vperm.slane %v1463, 0
  %v1557 = vmul.f32 %v1550, %v1555
  %v1558 = vmul.f32 %v1551, %v1555
  %v1559 = vmul.f32 %v1552, %v1555
  %v1560 = vmul.f32 %v1553, %v1555
  %v1562 = vperm.slane %v1465, 0
  %v1564 = vadd.f32 %v1557, %v1562
  %v1565 = vadd.f32 %v1558, %v1562
  %v1566 = vadd.f32 %v1559, %v1562
  %v1567 = vadd.f32 %v1560, %v1562
  %v1568 = vpack.c.bf16 %v1565, %v1564
  %v1569 = vpack.c.bf16 %v1567, %v1566
  %s1570 = scalar_lea.vmem %s10, 16
  %v1571 = vld [vmem:[%s1570] sm:$0xf]
  %v1572 = vld [vmem:[%s1570 + $0x4] sm:$0xf]
  %v1573 = vld [vmem:[%s1570 + $0x8] sm:$0xf]
  %v1574 = vld [vmem:[%s1570 + $0xc] sm:$0xf]
  %s1575 = scalar_lea.vmem %s11, 1
  %v1576 = vld [vmem:[%s1575] sm:$0x1]
  %v1578 = vperm.slane %v1576, 0
  %v1584 = vunpack.c.l.b16 %v1571
  %v1585 = vunpack.c.l.b16 %v1572
  %v1586 = vunpack.c.l.b16 %v1573
  %v1587 = vunpack.c.l.b16 %v1574
  %v1588 = vpack.c.b16 %v1585, %v1584
  %v1589 = vpack.c.b16 %v1587, %v1586
  %v1593 = vsel %vm298, %v1568, 0
  %v1596 = vsel %vm298, %v1569, 0
  %1598 = vmatpush.bf16.msra.mxu0 0
  %1599 = vmatpush.bf16.msra.mxu0 0
  %1600 = vmatpush.bf16.msra.mxu0 0
  %1601 = vmatpush.bf16.msra.mxu0 0
  %1602 = vmatpush.bf16.msra.mxu0 0
  %1603 = vmatpush.bf16.msra.mxu0 0
  %1604 = vmatpush.bf16.msra.mxu0 %v1589
  %1605 = vmatpush.bf16.msra.mxu0 %v1588
  %1606 = vmatmul.bf16.gmra.mxu0 %v1593
  %v1607 = vpop.f32.mrf.mxu0
  %v1608 = vadd.f32 %v1578, %v1607
  %v1609 = vpop.f32.mrf.mxu0
  %v1610 = vadd.f32 %v1578, %v1609
  %1611 = vmatmul.bf16.gmra.mxu0 %v1596
  %v1612 = vpop.f32.mrf.mxu0
  %v1613 = vadd.f32 %v1578, %v1612
  %v1614 = vpop.f32.mrf.mxu0
  %v1615 = vadd.f32 %v1578, %v1614
  %1616 = vdwg.mxu0
  %v1617 = vmul.f32 %v1608, %v1608
  %v1618 = vmul.f32 %v1610, %v1610
  %v1619 = vmul.f32 %v1613, %v1613
  %v1620 = vmul.f32 %v1615, %v1615
  %v1621 = vmul.f32 %v1608, %v1617
  %v1622 = vmul.f32 %v1610, %v1618
  %v1623 = vmul.f32 %v1613, %v1619
  %v1624 = vmul.f32 %v1615, %v1620
  %v1625 = vmul.f32 %v1621, 0.044715
  %v1626 = vmul.f32 %v1622, 0.044715
  %v1627 = vmul.f32 %v1623, 0.044715
  %v1628 = vmul.f32 %v1624, 0.044715
  %v1629 = vadd.f32 %v1608, %v1625
  %v1630 = vadd.f32 %v1610, %v1626
  %v1631 = vadd.f32 %v1613, %v1627
  %v1632 = vadd.f32 %v1615, %v1628
  %v1633 = vmul.f32 %v1629, 0.7978846
  %v1634 = vmul.f32 %v1630, 0.7978846
  %v1635 = vmul.f32 %v1631, 0.7978846
  %v1636 = vmul.f32 %v1632, 0.7978846
  %v1637 = vtanh.pop %v1633
  %v1638 = vtanh.pop %v1634
  %v1639 = vtanh.pop %v1635
  %v1640 = vtanh.pop %v1636
  %v1641 = vadd.f32 %v1637, 1.0
  %v1642 = vadd.f32 %v1638, 1.0
  %v1643 = vadd.f32 %v1639, 1.0
  %v1644 = vadd.f32 %v1640, 1.0
  %v1645 = vmul.f32 %v1641, 0.5
  %v1646 = vmul.f32 %v1642, 0.5
  %v1647 = vmul.f32 %v1643, 0.5
  %v1648 = vmul.f32 %v1644, 0.5
  %v1649 = vmul.f32 %v1608, %v1645
  %v1650 = vmul.f32 %v1610, %v1646
  %v1651 = vmul.f32 %v1613, %v1647
  %v1652 = vmul.f32 %v1615, %v1648
  %v1653 = vpack.c.bf16 %v1650, %v1649
  %v1654 = vpack.c.bf16 %v1652, %v1651
  %s1655 = scalar_lea.vmem %s12, 64
  %v1656 = vld [vmem:[%s1655] sm:$0xf]
  %v1657 = vld [vmem:[%s1655 + $0x4] sm:$0xf]
  %v1658 = vld [vmem:[%s1655 + $0x8] sm:$0xf]
  %v1659 = vld [vmem:[%s1655 + $0xc] sm:$0xf]
  %v1660 = vld [vmem:[%s1655 + $0x10] sm:$0xf]
  %v1661 = vld [vmem:[%s1655 + $0x14] sm:$0xf]
  %v1662 = vld [vmem:[%s1655 + $0x18] sm:$0xf]
  %v1663 = vld [vmem:[%s1655 + $0x1c] sm:$0xf]
  %v1664 = vld [vmem:[%s1655 + $0x20] sm:$0xf]
  %v1665 = vld [vmem:[%s1655 + $0x24] sm:$0xf]
  %v1666 = vld [vmem:[%s1655 + $0x28] sm:$0xf]
  %v1667 = vld [vmem:[%s1655 + $0x2c] sm:$0xf]
  %v1668 = vld [vmem:[%s1655 + $0x30] sm:$0xf]
  %v1669 = vld [vmem:[%s1655 + $0x34] sm:$0xf]
  %v1670 = vld [vmem:[%s1655 + $0x38] sm:$0xf]
  %v1671 = vld [vmem:[%s1655 + $0x3c] sm:$0xf]
  %s1672 = scalar_lea.vmem %s13, 1
  %v1673 = vld [vmem:[%s1672] sm:$0x1]
  %v1675 = vperm.slane %v1673, 0
  %v1693 = vunpack.c.l.b16 %v1656
  %v1694 = vunpack.c.l.b16 %v1657
  %v1695 = vunpack.c.l.b16 %v1658
  %v1696 = vunpack.c.l.b16 %v1659
  %v1697 = vunpack.c.l.b16 %v1660
  %v1698 = vunpack.c.l.b16 %v1661
  %v1699 = vunpack.c.l.b16 %v1662
  %v1700 = vunpack.c.l.b16 %v1663
  %v1701 = vunpack.c.l.b16 %v1664
  %v1702 = vunpack.c.l.b16 %v1665
  %v1703 = vunpack.c.l.b16 %v1666
  %v1704 = vunpack.c.l.b16 %v1667
  %v1705 = vunpack.c.l.b16 %v1668
  %v1706 = vunpack.c.l.b16 %v1669
  %v1707 = vunpack.c.l.b16 %v1670
  %v1708 = vunpack.c.l.b16 %v1671
  %v1709 = vpack.c.b16 %v1694, %v1693
  %v1710 = vpack.c.b16 %v1696, %v1695
  %v1711 = vpack.c.b16 %v1698, %v1697
  %v1712 = vpack.c.b16 %v1700, %v1699
  %v1713 = vpack.c.b16 %v1702, %v1701
  %v1714 = vpack.c.b16 %v1704, %v1703
  %v1715 = vpack.c.b16 %v1706, %v1705
  %v1716 = vpack.c.b16 %v1708, %v1707
  %1725 = vmatpush.bf16.msra.mxu0 %v1716
  %1726 = vmatpush.bf16.msra.mxu0 %v1715
  %1727 = vmatpush.bf16.msra.mxu0 %v1714
  %1728 = vmatpush.bf16.msra.mxu0 %v1713
  %1729 = vmatpush.bf16.msra.mxu0 %v1712
  %1730 = vmatpush.bf16.msra.mxu0 %v1711
  %1731 = vmatpush.bf16.msra.mxu0 %v1710
  %1732 = vmatpush.bf16.msra.mxu0 %v1709
  %1733 = vmatmul.bf16.gmra.mxu0 %v1653
  %v1734 = vpop.f32.mrf.mxu0
  %v1735 = vadd.f32 %v1675, %v1734
  %v1736 = vpop.f32.mrf.mxu0
  %v1737 = vadd.f32 %v1675, %v1736
  %1738 = vmatmul.bf16.gmra.mxu0 %v1654
  %v1739 = vpop.f32.mrf.mxu0
  %v1740 = vadd.f32 %v1675, %v1739
  %v1741 = vpop.f32.mrf.mxu0
  %v1742 = vadd.f32 %v1675, %v1741
  %1743 = vdwg.mxu0
  %v1744 = vadd.f32 %v1564, %v1735
  %v1745 = vadd.f32 %v1565, %v1737
  %v1746 = vadd.f32 %v1566, %v1740
  %v1747 = vadd.f32 %v1567, %v1742
  %s1748 = scalar_lea.vmem %s14, 1
  %v1749 = vld [vmem:[%s1748] sm:$0x1]
  %s1750 = scalar_lea.vmem %s15, 1
  %v1751 = vld [vmem:[%s1750] sm:$0x1]
  %v1752 = vsel %vm298, %v1744, 0.0
  %1753 = vadd.xlane.f32.xlu0 %v1752
  %v1754 = vpop.xlane.xlu0 %1753
  %v1755 = vsel %vm298, %v1745, 0.0
  %1756 = vadd.xlane.f32.xlu0 %v1755
  %v1757 = vpop.xlane.xlu0 %1756
  %v1758 = vsel %vm298, %v1746, 0.0
  %1759 = vadd.xlane.f32.xlu0 %v1758
  %v1760 = vpop.xlane.xlu0 %1759
  %v1761 = vsel %vm298, %v1747, 0.0
  %1762 = vadd.xlane.f32.xlu0 %v1761
  %v1763 = vpop.xlane.xlu0 %1762
  %v1764 = vmul.f32 %v1754, %v748
  %v1765 = vmul.f32 %v1757, %v748
  %v1766 = vmul.f32 %v1760, %v748
  %v1767 = vmul.f32 %v1763, %v748
  %v1768 = vsub.f32 %v1744, %v1764
  %v1769 = vsub.f32 %v1745, %v1765
  %v1770 = vsub.f32 %v1746, %v1766
  %v1771 = vsub.f32 %v1747, %v1767
  %v1772 = vmul.f32 %v1768, %v1768
  %v1773 = vmul.f32 %v1769, %v1769
  %v1774 = vmul.f32 %v1770, %v1770
  %v1775 = vmul.f32 %v1771, %v1771
  %v1776 = vsel %vm298, %v1772, 0.0
  %1777 = vadd.xlane.f32.xlu0 %v1776
  %v1778 = vpop.xlane.xlu0 %1777
  %v1779 = vsel %vm298, %v1773, 0.0
  %1780 = vadd.xlane.f32.xlu0 %v1779
  %v1781 = vpop.xlane.xlu0 %1780
  %v1782 = vsel %vm298, %v1774, 0.0
  %1783 = vadd.xlane.f32.xlu0 %v1782
  %v1784 = vpop.xlane.xlu0 %1783
  %v1785 = vsel %vm298, %v1775, 0.0
  %1786 = vadd.xlane.f32.xlu0 %v1785
  %v1787 = vpop.xlane.xlu0 %1786
  %v1788 = vmul.f32 %v1778, %v748
  %v1789 = vmul.f32 %v1781, %v748
  %v1790 = vmul.f32 %v1784, %v748
  %v1791 = vmul.f32 %v1787, %v748
  %v1792 = vadd.f32 %v1788, 1e-05
  %v1793 = vadd.f32 %v1789, 1e-05
  %v1794 = vadd.f32 %v1790, 1e-05
  %v1795 = vadd.f32 %v1791, 1e-05
  %v1796 = vrsqrt.pop %v1792
  %v1797 = vmul.f32 %v1796, %v1792
  %v1798 = vmul.f32 %v1797, %v1796
  %v1799 = vmul.f32 0.5, %v1798
  %v1800 = vsub.f32 1.5, %v1799
  %v1801 = vmul.f32 %v1796, %v1800
  %vm1802 = vweird.f32 %v1792
  %vm1803 = vweird.f32 %v1796
  %vm1804 = vmor %vm1802, %vm1803
  %v1805 = vsel %vm1804, %v1796, %v1801
  %v1806 = vrsqrt.pop %v1793
  %v1807 = vmul.f32 %v1806, %v1793
  %v1808 = vmul.f32 %v1807, %v1806
  %v1809 = vmul.f32 0.5, %v1808
  %v1810 = vsub.f32 1.5, %v1809
  %v1811 = vmul.f32 %v1806, %v1810
  %vm1812 = vweird.f32 %v1793
  %vm1813 = vweird.f32 %v1806
  %vm1814 = vmor %vm1812, %vm1813
  %v1815 = vsel %vm1814, %v1806, %v1811
  %v1816 = vrsqrt.pop %v1794
  %v1817 = vmul.f32 %v1816, %v1794
  %v1818 = vmul.f32 %v1817, %v1816
  %v1819 = vmul.f32 0.5, %v1818
  %v1820 = vsub.f32 1.5, %v1819
  %v1821 = vmul.f32 %v1816, %v1820
  %vm1822 = vweird.f32 %v1794
  %vm1823 = vweird.f32 %v1816
  %vm1824 = vmor %vm1822, %vm1823
  %v1825 = vsel %vm1824, %v1816, %v1821
  %v1826 = vrsqrt.pop %v1795
  %v1827 = vmul.f32 %v1826, %v1795
  %v1828 = vmul.f32 %v1827, %v1826
  %v1829 = vmul.f32 0.5, %v1828
  %v1830 = vsub.f32 1.5, %v1829
  %v1831 = vmul.f32 %v1826, %v1830
  %vm1832 = vweird.f32 %v1795
  %vm1833 = vweird.f32 %v1826
  %vm1834 = vmor %vm1832, %vm1833
  %v1835 = vsel %vm1834, %v1826, %v1831
  %v1836 = vmul.f32 %v1768, %v1805
  %v1837 = vmul.f32 %v1769, %v1815
  %v1838 = vmul.f32 %v1770, %v1825
  %v1839 = vmul.f32 %v1771, %v1835
  %v1841 = vperm.slane %v1749, 0
  %v1843 = vmul.f32 %v1836, %v1841
  %v1844 = vmul.f32 %v1837, %v1841
  %v1845 = vmul.f32 %v1838, %v1841
  %v1846 = vmul.f32 %v1839, %v1841
  %v1848 = vperm.slane %v1751, 0
  %v1850 = vadd.f32 %v1843, %v1848
  %v1851 = vadd.f32 %v1844, %v1848
  %v1852 = vadd.f32 %v1845, %v1848
  %v1853 = vadd.f32 %v1846, %v1848
  %v1854 = vpack.c.bf16 %v1851, %v1850
  %v1855 = vpack.c.bf16 %v1853, %v1852
  %v1856 = vld [vmem:[%s16] sm:$0xff]
  %v1857 = vld [vmem:[%s16 + $0x8] sm:$0xff]
  %v1858 = vld [vmem:[%s16 + $0x10] sm:$0xff]
  %v1859 = vld [vmem:[%s16 + $0x18] sm:$0xff]
  %v1860 = vld [vmem:[%s17] sm:$0x3]
  %v1862 = vperm.slane %v1860, 0
  %v1863 = vperm.slane %v1860, 1
  %v1870 = vunpack.c.l.b16 %v1856
  %v1871 = vunpack.c.h.b16 %v1856
  %v1872 = vunpack.c.l.b16 %v1857
  %v1873 = vunpack.c.h.b16 %v1857
  %v1874 = vunpack.c.l.b16 %v1858
  %v1875 = vunpack.c.h.b16 %v1858
  %v1876 = vunpack.c.l.b16 %v1859
  %v1877 = vunpack.c.h.b16 %v1859
  %v1878 = vpack.c.b16 %v1872, %v1870
  %v1879 = vpack.c.b16 %v1873, %v1871
  %v1880 = vpack.c.b16 %v1876, %v1874
  %v1881 = vpack.c.b16 %v1877, %v1875
  %v1887 = vsel %vm298, %v1854, 0
  %v1890 = vsel %vm298, %v1855, 0
  %1892 = vmatpush.bf16.msra.mxu0 0
  %1893 = vmatpush.bf16.msra.mxu0 0
  %1894 = vmatpush.bf16.msra.mxu0 0
  %1895 = vmatpush.bf16.msra.mxu0 0
  %1896 = vmatpush.bf16.msra.mxu0 0
  %1897 = vmatpush.bf16.msra.mxu0 0
  %1898 = vmatpush.bf16.msra.mxu0 %v1880
  %1899 = vmatpush.bf16.msra.mxu0 %v1878
  %1900 = vmatmul.bf16.gmra.mxu0 %v1887
  %v1901 = vpop.f32.mrf.mxu0
  %v1902 = vadd.f32 %v1862, %v1901
  %v1903 = vpop.f32.mrf.mxu0
  %v1904 = vadd.f32 %v1862, %v1903
  %1905 = vmatmul.bf16.gmra.mxu0 %v1890
  %v1906 = vpop.f32.mrf.mxu0
  %v1907 = vadd.f32 %v1862, %v1906
  %v1908 = vpop.f32.mrf.mxu0
  %v1909 = vadd.f32 %v1862, %v1908
  %1910 = vdwg.mxu0
  %1911 = vmatpush.bf16.msra.mxu0 0
  %1912 = vmatpush.bf16.msra.mxu0 0
  %1913 = vmatpush.bf16.msra.mxu0 0
  %1914 = vmatpush.bf16.msra.mxu0 0
  %1915 = vmatpush.bf16.msra.mxu0 0
  %1916 = vmatpush.bf16.msra.mxu0 0
  %1917 = vmatpush.bf16.msra.mxu0 %v1881
  %1918 = vmatpush.bf16.msra.mxu0 %v1879
  %1919 = vmatmul.bf16.gmra.mxu0 %v1887
  %v1920 = vpop.f32.mrf.mxu0
  %v1921 = vadd.f32 %v1863, %v1920
  %v1922 = vpop.f32.mrf.mxu0
  %v1923 = vadd.f32 %v1863, %v1922
  %1924 = vmatmul.bf16.gmra.mxu0 %v1890
  %v1925 = vpop.f32.mrf.mxu0
  %v1926 = vadd.f32 %v1863, %v1925
  %v1927 = vpop.f32.mrf.mxu0
  %v1928 = vadd.f32 %v1863, %v1927
  %1929 = vdwg.mxu0
  %v1930 = vmax.f32 %v1902, 0.0
  %v1931 = vmax.f32 %v1921, 0.0
  %v1932 = vmax.f32 %v1904, 0.0
  %v1933 = vmax.f32 %v1923, 0.0
  %v1934 = vmax.f32 %v1907, 0.0
  %v1935 = vmax.f32 %v1926, 0.0
  %v1936 = vmax.f32 %v1909, 0.0
  %v1937 = vmax.f32 %v1928, 0.0
  %v1938 = vpack.c.bf16 %v1932, %v1930
  %v1939 = vpack.c.bf16 %v1933, %v1931
  %v1940 = vpack.c.bf16 %v1936, %v1934
  %v1941 = vpack.c.bf16 %v1937, %v1935
  %v1942 = vld [vmem:[%s18] sm:$0xf]
  %v1943 = vld [vmem:[%s18 + $0x4] sm:$0xf]
  %v1944 = vld [vmem:[%s18 + $0x8] sm:$0xf]
  %v1945 = vld [vmem:[%s18 + $0xc] sm:$0xf]
  %v1946 = vld [vmem:[%s18 + $0x10] sm:$0xf]
  %v1947 = vld [vmem:[%s18 + $0x14] sm:$0xf]
  %v1948 = vld [vmem:[%s18 + $0x18] sm:$0xf]
  %v1949 = vld [vmem:[%s18 + $0x1c] sm:$0xf]
  %v1950 = vld [vmem:[%s18 + $0x20] sm:$0xf]
  %v1951 = vld [vmem:[%s18 + $0x24] sm:$0xf]
  %v1952 = vld [vmem:[%s18 + $0x28] sm:$0xf]
  %v1953 = vld [vmem:[%s18 + $0x2c] sm:$0xf]
  %v1954 = vld [vmem:[%s18 + $0x30] sm:$0xf]
  %v1955 = vld [vmem:[%s18 + $0x34] sm:$0xf]
  %v1956 = vld [vmem:[%s18 + $0x38] sm:$0xf]
  %v1957 = vld [vmem:[%s18 + $0x3c] sm:$0xf]
  %v1958 = vld [vmem:[%s18 + $0x40] sm:$0xf]
  %v1959 = vld [vmem:[%s18 + $0x44] sm:$0xf]
  %v1960 = vld [vmem:[%s18 + $0x48] sm:$0xf]
  %v1961 = vld [vmem:[%s18 + $0x4c] sm:$0xf]
  %v1962 = vld [vmem:[%s18 + $0x50] sm:$0xf]
  %v1963 = vld [vmem:[%s18 + $0x54] sm:$0xf]
  %v1964 = vld [vmem:[%s18 + $0x58] sm:$0xf]
  %v1965 = vld [vmem:[%s18 + $0x5c] sm:$0xf]
  %v1966 = vld [vmem:[%s18 + $0x60] sm:$0xf]
  %v1967 = vld [vmem:[%s18 + $0x64] sm:$0xf]
  %v1968 = vld [vmem:[%s18 + $0x68] sm:$0xf]
  %v1969 = vld [vmem:[%s18 + $0x6c] sm:$0xf]
  %v1970 = vld [vmem:[%s18 + $0x70] sm:$0xf]
  %v1971 = vld [vmem:[%s18 + $0x74] sm:$0xf]
  %v1972 = vld [vmem:[%s18 + $0x78] sm:$0xf]
  %v1973 = vld [vmem:[%s18 + $0x7c] sm:$0xf]
  %v1974 = vld [vmem:[%s19] sm:$0x1]
  %v1976 = vperm.slane %v1974, 0
  %v2010 = vunpack.c.l.b16 %v1942
  %v2011 = vunpack.c.l.b16 %v1943
  %v2012 = vunpack.c.l.b16 %v1944
  %v2013 = vunpack.c.l.b16 %v1945
  %v2014 = vunpack.c.l.b16 %v1946
  %v2015 = vunpack.c.l.b16 %v1947
  %v2016 = vunpack.c.l.b16 %v1948
  %v2017 = vunpack.c.l.b16 %v1949
  %v2018 = vunpack.c.l.b16 %v1950
  %v2019 = vunpack.c.l.b16 %v1951
  %v2020 = vunpack.c.l.b16 %v1952
  %v2021 = vunpack.c.l.b16 %v1953
  %v2022 = vunpack.c.l.b16 %v1954
  %v2023 = vunpack.c.l.b16 %v1955
  %v2024 = vunpack.c.l.b16 %v1956
  %v2025 = vunpack.c.l.b16 %v1957
  %v2026 = vunpack.c.l.b16 %v1958
  %v2027 = vunpack.c.l.b16 %v1959
  %v2028 = vunpack.c.l.b16 %v1960
  %v2029 = vunpack.c.l.b16 %v1961
  %v2030 = vunpack.c.l.b16 %v1962
  %v2031 = vunpack.c.l.b16 %v1963
  %v2032 = vunpack.c.l.b16 %v1964
  %v2033 = vunpack.c.l.b16 %v1965
  %v2034 = vunpack.c.l.b16 %v1966
  %v2035 = vunpack.c.l.b16 %v1967
  %v2036 = vunpack.c.l.b16 %v1968
  %v2037 = vunpack.c.l.b16 %v1969
  %v2038 = vunpack.c.l.b16 %v1970
  %v2039 = vunpack.c.l.b16 %v1971
  %v2040 = vunpack.c.l.b16 %v1972
  %v2041 = vunpack.c.l.b16 %v1973
  %v2042 = vpack.c.b16 %v2011, %v2010
  %v2043 = vpack.c.b16 %v2013, %v2012
  %v2044 = vpack.c.b16 %v2015, %v2014
  %v2045 = vpack.c.b16 %v2017, %v2016
  %v2046 = vpack.c.b16 %v2019, %v2018
  %v2047 = vpack.c.b16 %v2021, %v2020
  %v2048 = vpack.c.b16 %v2023, %v2022
  %v2049 = vpack.c.b16 %v2025, %v2024
  %v2050 = vpack.c.b16 %v2027, %v2026
  %v2051 = vpack.c.b16 %v2029, %v2028
  %v2052 = vpack.c.b16 %v2031, %v2030
  %v2053 = vpack.c.b16 %v2033, %v2032
  %v2054 = vpack.c.b16 %v2035, %v2034
  %v2055 = vpack.c.b16 %v2037, %v2036
  %v2056 = vpack.c.b16 %v2039, %v2038
  %v2057 = vpack.c.b16 %v2041, %v2040
  %2074 = vmatpush.bf16.msra.mxu0 %v2049
  %2075 = vmatpush.bf16.msra.mxu0 %v2048
  %2076 = vmatpush.bf16.msra.mxu0 %v2047
  %2077 = vmatpush.bf16.msra.mxu0 %v2046
  %2078 = vmatpush.bf16.msra.mxu0 %v2045
  %2079 = vmatpush.bf16.msra.mxu0 %v2044
  %2080 = vmatpush.bf16.msra.mxu0 %v2043
  %2081 = vmatpush.bf16.msra.mxu0 %v2042
  %2082 = vmatmul.bf16.gmra.mxu0 %v1938
  %v2083 = vpop.f32.mrf.mxu0
  %v2084 = vadd.f32 %v1976, %v2083
  %v2085 = vpop.f32.mrf.mxu0
  %v2086 = vadd.f32 %v1976, %v2085
  %2087 = vmatmul.bf16.gmra.mxu0 %v1940
  %v2088 = vpop.f32.mrf.mxu0
  %v2089 = vadd.f32 %v1976, %v2088
  %v2090 = vpop.f32.mrf.mxu0
  %v2091 = vadd.f32 %v1976, %v2090
  %2092 = vdwg.mxu0
  %2093 = vmatpush.bf16.msra.mxu0 %v2057
  %2094 = vmatpush.bf16.msra.mxu0 %v2056
  %2095 = vmatpush.bf16.msra.mxu0 %v2055
  %2096 = vmatpush.bf16.msra.mxu0 %v2054
  %2097 = vmatpush.bf16.msra.mxu0 %v2053
  %2098 = vmatpush.bf16.msra.mxu0 %v2052
  %2099 = vmatpush.bf16.msra.mxu0 %v2051
  %2100 = vmatpush.bf16.msra.mxu0 %v2050
  %2101 = vmatmul.bf16.gmra.mxu0 %v1939
  %v2102 = vpop.f32.mrf.mxu0
  %v2103 = vadd.f32 %v2084, %v2102
  %v2104 = vpop.f32.mrf.mxu0
  %v2105 = vadd.f32 %v2086, %v2104
  %2106 = vmatmul.bf16.gmra.mxu0 %v1941
  %v2107 = vpop.f32.mrf.mxu0
  %v2108 = vadd.f32 %v2089, %v2107
  %v2109 = vpop.f32.mrf.mxu0
  %v2110 = vadd.f32 %v2091, %v2109
  %2111 = vdwg.mxu0
  %2112 = vst.msk [vmem:[%s23] sm:$0xff] %vm223, %v2103
  %2113 = vst.msk [vmem:[%s23 + $0x8] sm:$0xff] %vm223, %v2105
  %2114 = vst.msk [vmem:[%s23 + $0x10] sm:$0xff] %vm223, %v2108
  %2115 = vst.msk [vmem:[%s23 + $0x18] sm:$0xff] %vm223, %v2110
  // Predicated region
  $region94: #{small_vit_forward.1} parent=0 // pred_check
    _
  $region95: #{small_vit_forward.1} parent=0 // pred_check_branch
    %2117 = sbr.rel (0) target = $region97
  $region96: #{small_vit_forward.1} parent=0 // pred_region
    _
  $region97: #{small_vit_forward.1} parent=0 // pred_fallthru
    _
  // Predicated region
  $region98: #{small_vit_forward.1} parent=0 // pred_check
    _
  $region99: #{small_vit_forward.1} parent=0 // pred_check_branch
    %2119 = sbr.rel (0) target = $region101
  $region100: #{small_vit_forward.1} parent=0 // pred_region
    _
  $region101: #{small_vit_forward.1} parent=0 // pred_fallthru
    _

</llo_original>
